<compile_context>
chip_gen: v5e
topology: v5e:2x2
jax: 0.10.0
libtpu: 0.0.40
codegen_flags: <defaults>
</compile_context>

<pallas_src>
import jax
import jax.numpy as jnp
from jax.experimental import pallas as pl
from jax.experimental.pallas import tpu as pltpu

NUM_CLASSES = 10
IN_FEATURES = 32 * 32 * 3   # 3072
H1, H2 = 200, 150
# Lane-aligned padded dims (multiples of 128). Zero padding is exact through ReLU.
H1P, H2P, OUTP = 256, 256, 128


def mlp_kernel(x_ref, w1_ref, b1_ref, w2_ref, b2_ref, w3_ref, b3_ref, out_ref):
    # x / weights are bf16 (MXU native), accumulation in f32, bias/ReLU in f32 (VPU).
    h1 = jnp.dot(x_ref[...], w1_ref[...], preferred_element_type=jnp.float32)
    h1 = jnp.maximum(h1 + b1_ref[...], 0.0)
    h2 = jnp.dot(h1.astype(jnp.bfloat16), w2_ref[...],
                 preferred_element_type=jnp.float32)
    h2 = jnp.maximum(h2 + b2_ref[...], 0.0)
    out = jnp.dot(h2.astype(jnp.bfloat16), w3_ref[...],
                  preferred_element_type=jnp.float32)
    out_ref[...] = (out + b3_ref[...]).astype(out_ref.dtype)


def _round_up(n, m):
    return (n + m - 1) // m * m


def prepare_params(params):
    """Pad to lane-aligned dims and cast weights to bf16 (biases stay f32)."""
    w1, b1, w2, b2, w3, b3 = params

    def pad2(a, rows, cols):
        return jnp.pad(a, ((0, rows - a.shape[0]), (0, cols - a.shape[1])))

    w1p = pad2(w1, IN_FEATURES, H1P).astype(jnp.bfloat16)
    b1p = pad2(b1, 1, H1P).astype(jnp.float32)
    w2p = pad2(w2, H1P, H2P).astype(jnp.bfloat16)
    b2p = pad2(b2, 1, H2P).astype(jnp.float32)
    w3p = pad2(w3, H2P, OUTP).astype(jnp.bfloat16)
    b3p = pad2(b3, 1, OUTP).astype(jnp.float32)
    return (w1p, b1p, w2p, b2p, w3p, b3p)


def mlp_forward(x_nchw, padded_params, *, block_b=512):
    """x_nchw: (B, 3, 32, 32) f32 -> logits (B, 10) f32."""
    w1, b1, w2, b2, w3, b3 = padded_params
    B = x_nchw.shape[0]
    # nn.Flatten on NCHW == plain reshape; cast to bf16 to halve x HBM traffic.
    x = x_nchw.reshape(B, IN_FEATURES).astype(jnp.bfloat16)

    # Batch tile: multiple of 8 sublanes, capped at block_b; pad batch to fit.
    tb = min(block_b, _round_up(B, 8))
    bp = _round_up(B, tb)
    if bp != B:
        x = jnp.pad(x, ((0, bp - B), (0, 0)))
    grid = (bp // tb,)

    def tile_spec(shape):           # tiled over the batch grid axis
        return pl.BlockSpec(shape, lambda i: (i, 0))

    def resident_spec(shape):       # constant block index -> stays VMEM-resident
        return pl.BlockSpec(shape, lambda i: (0, 0))

    flops = 2 * bp * (IN_FEATURES * H1P + H1P * H2P + H2P * OUTP)
    bytes_accessed = (
        bp * IN_FEATURES * 2                       # x (bf16)
        + (w1.size + w2.size + w3.size) * 2        # weights (bf16)
        + (b1.size + b2.size + b3.size) * 4        # biases (f32)
        + bp * OUTP * 4                            # output (f32)
    )

    out = pl.pallas_call(
        mlp_kernel,
        out_shape=jax.ShapeDtypeStruct((bp, OUTP), jnp.float32),
        grid=grid,
        in_specs=[
            tile_spec((tb, IN_FEATURES)),
            resident_spec((IN_FEATURES, H1P)),
            resident_spec((1, H1P)),
            resident_spec((H1P, H2P)),
            resident_spec((1, H2P)),
            resident_spec((H2P, OUTP)),
            resident_spec((1, OUTP)),
        ],
        out_specs=tile_spec((tb, OUTP)),
        compiler_params=pltpu.CompilerParams(
            dimension_semantics=("parallel",),
            vmem_limit_bytes=48 << 20,   # headroom below v7x's 64 MiB physical VMEM
        ),
        cost_estimate=pl.CostEstimate(
            flops=flops, transcendentals=0, bytes_accessed=bytes_accessed),
    )(x, w1, b1, w2, b2, w3, b3)

    return out[:B, :NUM_CLASSES]


def init_params(key):
    """Deterministic init matching PyTorch Linear shapes (stored transposed)."""
    ks = jax.random.split(key, 6)

    def linear(kw, kb, fan_in, fan_out):
        bound = 1.0 / jnp.sqrt(fan_in)
        w = jax.random.uniform(kw, (fan_in, fan_out), jnp.float32, -bound, bound)
        b = jax.random.uniform(kb, (1, fan_out), jnp.float32, -bound, bound)
        return w, b

    w1, b1 = linear(ks[0], ks[1], IN_FEATURES, H1)
    w2, b2 = linear(ks[2], ks[3], H1, H2)
    w3, b3 = linear(ks[4], ks[5], H2, NUM_CLASSES)
    return (w1, b1, w2, b2, w3, b3)


def reference_forward_f32(x_nchw, params):
    """Original module semantics, full f32 (precision baseline)."""
    w1, b1, w2, b2, w3, b3 = params
    x = x_nchw.reshape(x_nchw.shape[0], IN_FEATURES)
    h1 = jnp.maximum(x @ w1 + b1, 0.0)
    h2 = jnp.maximum(h1 @ w2 + b2, 0.0)
    return h2 @ w3 + b3


def reference_forward_matched(x_nchw, padded_params):
    """Same bf16-in / f32-acc numerics as the kernel (tight correctness check)."""
    w1, b1, w2, b2, w3, b3 = padded_params
    B = x_nchw.shape[0]
    x = x_nchw.reshape(B, IN_FEATURES).astype(jnp.bfloat16)
    h1 = jnp.maximum(
        jnp.dot(x, w1, preferred_element_type=jnp.float32) + b1, 0.0)
    h2 = jnp.maximum(
        jnp.dot(h1.astype(jnp.bfloat16), w2, preferred_element_type=jnp.float32) + b2, 0.0)
    out = jnp.dot(h2.astype(jnp.bfloat16), w3, preferred_element_type=jnp.float32) + b3
    return out[:, :NUM_CLASSES]


if __name__ == "__main__":
    key = jax.random.PRNGKey(0)
    k_x, k_p = jax.random.split(key)

    B = 2  # NOTE: tune / benchmark with realistic batch sizes; B=2 is launch-overhead only.
    x = jax.random.normal(k_x, (B, 3, 32, 32), jnp.float32)  # NCHW like PyTorch
    params = init_params(k_p)
    padded_params = prepare_params(params)

    out = mlp_forward(x, padded_params)
    out = jax.block_until_ready(out)
    assert out.shape == (B, NUM_CLASSES)

    # Tight check against a reference using identical bf16/f32-acc numerics.
    ref_matched = reference_forward_matched(x, padded_params)
    assert jnp.allclose(out, ref_matched, atol=1e-3, rtol=1e-3), \
        "mismatch vs matched-precision reference"

    # Loose check against the original f32 semantics (bf16 is an intentional change).
    ref_f32 = reference_forward_f32(x, params)
    assert jnp.allclose(out, ref_f32, atol=1e-1, rtol=1e-1), \
        "mismatch vs f32 reference"

    print("KERNEL_OK")
</pallas_src>

<mosaic_0001>
module attributes {stable_mosaic.version = 11 : i64} {
  func.func @mlp_kernel(%arg0: i32, %arg1: memref<8x3072xbf16, #tpu.memory_space<vmem>>, %arg2: memref<3072x256xbf16, #tpu.memory_space<vmem>>, %arg3: memref<1x256xf32, #tpu.memory_space<vmem>>, %arg4: memref<256x256xbf16, #tpu.memory_space<vmem>>, %arg5: memref<1x256xf32, #tpu.memory_space<vmem>>, %arg6: memref<256x128xbf16, #tpu.memory_space<vmem>>, %arg7: memref<1x128xf32, #tpu.memory_space<vmem>>, %arg8: memref<8x128xf32, #tpu.memory_space<vmem>>) attributes {dimension_semantics = [#tpu.dimension_semantics<parallel>], iteration_bounds = array<i64: 1>, scalar_prefetch = 0 : i64, scratch_operands = 0 : i64, tpu.core_type = #tpu.core_type<tc>, window_params = [{transform_indices = @transform_0, window_bounds = array<i64: 8, 3072>}, {pipeline_mode = #tpu.pipeline_mode<synchronous>, transform_indices = @transform_1, window_bounds = array<i64: 3072, 256>}, {pipeline_mode = #tpu.pipeline_mode<synchronous>, transform_indices = @transform_2, window_bounds = array<i64: 1, 256>}, {pipeline_mode = #tpu.pipeline_mode<synchronous>, transform_indices = @transform_3, window_bounds = array<i64: 256, 256>}, {pipeline_mode = #tpu.pipeline_mode<synchronous>, transform_indices = @transform_4, window_bounds = array<i64: 1, 256>}, {pipeline_mode = #tpu.pipeline_mode<synchronous>, transform_indices = @transform_5, window_bounds = array<i64: 256, 128>}, {pipeline_mode = #tpu.pipeline_mode<synchronous>, transform_indices = @transform_6, window_bounds = array<i64: 1, 128>}, {transform_indices = @transform_7, window_bounds = array<i64: 8, 128>}]} {
    %c0 = arith.constant 0 : index
    %c0_0 = arith.constant 0 : index
    %0 = vector.load %arg1[%c0, %c0_0] : memref<8x3072xbf16, #tpu.memory_space<vmem>>, vector<8x3072xbf16>
    %c0_1 = arith.constant 0 : index
    %c0_2 = arith.constant 0 : index
    %1 = vector.load %arg2[%c0_1, %c0_2] : memref<3072x256xbf16, #tpu.memory_space<vmem>>, vector<3072x256xbf16>
    %cst = arith.constant dense<0.000000e+00> : vector<8x256xf32>
    %2 = tpu.matmul %0, %1, %cst {dimension_numbers = #tpu.dot_dimension_numbers<[1], [0], [0], [1], [0, 0, 1, 1], [], []>} : vector<8x3072xbf16>, vector<3072x256xbf16>, vector<8x256xf32> -> vector<8x256xf32>
    %c0_3 = arith.constant 0 : index
    %c0_4 = arith.constant 0 : index
    %3 = vector.load %arg3[%c0_3, %c0_4] : memref<1x256xf32, #tpu.memory_space<vmem>>, vector<1x256xf32>
    %4 = vector.broadcast %3 : vector<1x256xf32> to vector<8x256xf32>
    %5 = arith.addf %2, %4 : vector<8x256xf32>
    %cst_5 = arith.constant 0.000000e+00 : f32
    %6 = vector.broadcast %cst_5 : f32 to vector<8x256xf32>
    %7 = arith.maximumf %5, %6 : vector<8x256xf32>
    %8 = arith.truncf %7 : vector<8x256xf32> to vector<8x256xbf16>
    %c0_6 = arith.constant 0 : index
    %c0_7 = arith.constant 0 : index
    %9 = vector.load %arg4[%c0_6, %c0_7] : memref<256x256xbf16, #tpu.memory_space<vmem>>, vector<256x256xbf16>
    %cst_8 = arith.constant dense<0.000000e+00> : vector<8x256xf32>
    %10 = tpu.matmul %8, %9, %cst_8 {dimension_numbers = #tpu.dot_dimension_numbers<[1], [0], [0], [1], [0, 0, 1, 1], [], []>} : vector<8x256xbf16>, vector<256x256xbf16>, vector<8x256xf32> -> vector<8x256xf32>
    %c0_9 = arith.constant 0 : index
    %c0_10 = arith.constant 0 : index
    %11 = vector.load %arg5[%c0_9, %c0_10] : memref<1x256xf32, #tpu.memory_space<vmem>>, vector<1x256xf32>
    %12 = vector.broadcast %11 : vector<1x256xf32> to vector<8x256xf32>
    %13 = arith.addf %10, %12 : vector<8x256xf32>
    %cst_11 = arith.constant 0.000000e+00 : f32
    %14 = vector.broadcast %cst_11 : f32 to vector<8x256xf32>
    %15 = arith.maximumf %13, %14 : vector<8x256xf32>
    %16 = arith.truncf %15 : vector<8x256xf32> to vector<8x256xbf16>
    %c0_12 = arith.constant 0 : index
    %c0_13 = arith.constant 0 : index
    %17 = vector.load %arg6[%c0_12, %c0_13] : memref<256x128xbf16, #tpu.memory_space<vmem>>, vector<256x128xbf16>
    %cst_14 = arith.constant dense<0.000000e+00> : vector<8x128xf32>
    %18 = tpu.matmul %16, %17, %cst_14 {dimension_numbers = #tpu.dot_dimension_numbers<[1], [0], [0], [1], [0, 0, 1, 1], [], []>} : vector<8x256xbf16>, vector<256x128xbf16>, vector<8x128xf32> -> vector<8x128xf32>
    %c0_15 = arith.constant 0 : index
    %c0_16 = arith.constant 0 : index
    %19 = vector.load %arg7[%c0_15, %c0_16] : memref<1x128xf32, #tpu.memory_space<vmem>>, vector<1x128xf32>
    %20 = vector.broadcast %19 : vector<1x128xf32> to vector<8x128xf32>
    %21 = arith.addf %18, %20 : vector<8x128xf32>
    %c0_17 = arith.constant 0 : index
    %c0_18 = arith.constant 0 : index
    %22 = vector.load %arg8[%c0_17, %c0_18] : memref<8x128xf32, #tpu.memory_space<vmem>>, vector<8x128xf32>
    tpu.vector_store %arg8[%c0_17, %c0_18], %21 {strides = array<i32>} : memref<8x128xf32, #tpu.memory_space<vmem>>, vector<8x128xf32>,
    return
  }
  func.func @transform_0(%arg0: i32) -> (i32, i32) {
    %c0_i32 = arith.constant 0 : i32
    %c0_i32_0 = arith.constant 0 : i32
    return %arg0, %c0_i32 : i32, i32
  }
  func.func @transform_1(%arg0: i32) -> (i32, i32) {
    %c0_i32 = arith.constant 0 : i32
    %c0_i32_0 = arith.constant 0 : i32
    %c0_i32_1 = arith.constant 0 : i32
    return %c0_i32, %c0_i32_0 : i32, i32
  }
  func.func @transform_2(%arg0: i32) -> (i32, i32) {
    %c0_i32 = arith.constant 0 : i32
    %c0_i32_0 = arith.constant 0 : i32
    %c0_i32_1 = arith.constant 0 : i32
    return %c0_i32, %c0_i32_0 : i32, i32
  }
  func.func @transform_3(%arg0: i32) -> (i32, i32) {
    %c0_i32 = arith.constant 0 : i32
    %c0_i32_0 = arith.constant 0 : i32
    %c0_i32_1 = arith.constant 0 : i32
    return %c0_i32, %c0_i32_0 : i32, i32
  }
  func.func @transform_4(%arg0: i32) -> (i32, i32) {
    %c0_i32 = arith.constant 0 : i32
    %c0_i32_0 = arith.constant 0 : i32
    %c0_i32_1 = arith.constant 0 : i32
    return %c0_i32, %c0_i32_0 : i32, i32
  }
  func.func @transform_5(%arg0: i32) -> (i32, i32) {
    %c0_i32 = arith.constant 0 : i32
    %c0_i32_0 = arith.constant 0 : i32
    %c0_i32_1 = arith.constant 0 : i32
    return %c0_i32, %c0_i32_0 : i32, i32
  }
  func.func @transform_6(%arg0: i32) -> (i32, i32) {
    %c0_i32 = arith.constant 0 : i32
    %c0_i32_0 = arith.constant 0 : i32
    %c0_i32_1 = arith.constant 0 : i32
    return %c0_i32, %c0_i32_0 : i32, i32
  }
  func.func @transform_7(%arg0: i32) -> (i32, i32) {
    %c0_i32 = arith.constant 0 : i32
    %c0_i32_0 = arith.constant 0 : i32
    return %arg0, %c0_i32 : i32, i32
  }
}

</mosaic_0001>

<llo_original>
// kernel: tpu_custom_call.1
$region0: #{tpu_custom_call.1}
  #allocation0 [shape = 'u32[]', space=smem, size = 0x4, offset = 0x4, fixed_abs, tag = 'smem constant byte address 0x4 - core index']
  #allocation1 [shape = 'u32[72,128]{1,0:T(1,128)}', space=vmem, size = 0x9000, scoped, tag = 'internal scratch']
  %s0 = inlined_call_operand.hbm [shape: bf16[8,3072], index: 0, kind: input, shape index: {}]
  %s1 = inlined_call_operand.hbm [shape: bf16[3072,256], index: 1, kind: input, shape index: {}]
  %s2 = inlined_call_operand.hbm [shape: f32[1,256], index: 2, kind: input, shape index: {}]
  %s3 = inlined_call_operand.hbm [shape: bf16[256,256], index: 3, kind: input, shape index: {}]
  %s4 = inlined_call_operand.hbm [shape: f32[1,256], index: 4, kind: input, shape index: {}]
  %s5 = inlined_call_operand.hbm [shape: bf16[256,128], index: 5, kind: input, shape index: {}]
  %s6 = inlined_call_operand.hbm [shape: f32[1,128], index: 6, kind: input, shape index: {}]
  %s7 = inlined_call_operand.hbm [shape: f32[8,128], index: 7, kind: output, shape index: {}]
  %s8 = sld [smem:[#allocation0]]
  $region66: #{tpu_custom_call.1} parent=0
    _
  %s10 = ssub.s32 1, %s8
  %s11 = scalar_select 0, %s10, %s8
  $region1: #{tpu_custom_call.1} parent=0
    #allocation2 [shape = 'u8[49152]{0}', space=vmem, size = 0xc000, scoped, tag = 'input window, operand 0, single buffered']
    #allocation3 [shape = 's32[1]{0}', space=sflag, size = 0x4, scoped, tag = 'scoped memory for tpu_custom_call.1']
    #allocation4 [shape = 's32[1]{0}', space=sflag, size = 0x4, scoped, tag = 'scoped memory for tpu_custom_call.1']
    #allocation5 [shape = 'u8[1572864]{0}', space=vmem, size = 0x180000, scoped, tag = 'input window, operand 1, single buffered']
    #allocation6 [shape = 's32[1]{0}', space=sflag, size = 0x4, scoped, tag = 'scoped memory for tpu_custom_call.1']
    #allocation7 [shape = 'u8[1024]{0}', space=vmem, size = 0x400, scoped, tag = 'input window, operand 2, single buffered']
    #allocation8 [shape = 'u8[131072]{0}', space=vmem, size = 0x20000, scoped, tag = 'input window, operand 3, single buffered']
    #allocation9 [shape = 's32[1]{0}', space=sflag, size = 0x4, scoped, tag = 'scoped memory for tpu_custom_call.1']
    #allocation10 [shape = 'u8[1024]{0}', space=vmem, size = 0x400, scoped, tag = 'input window, operand 4, single buffered']
    #allocation11 [shape = 'u8[65536]{0}', space=vmem, size = 0x10000, scoped, tag = 'input window, operand 5, single buffered']
    #allocation12 [shape = 's32[1]{0}', space=sflag, size = 0x4, scoped, tag = 'scoped memory for tpu_custom_call.1']
    #allocation13 [shape = 'u8[512]{0}', space=vmem, size = 0x400, scoped, tag = 'input window, operand 6, single buffered']
    #allocation14 [shape = 'u8[4096]{0}', space=vmem, size = 0x1000, scoped, tag = 'output window, operand 0, single buffered']
    %12 = vsyncpa [#allocation3], 0
    %13 = vsyncpa [#allocation6], 0
    %14 = vsyncpa [#allocation9], 0
    %15 = vsyncpa [#allocation12], 0
    %16 = vsyncpa [#allocation4], 0
    // Predicated region
    $region2: #{tpu_custom_call.1} parent=1 // pred_check
      _
    $region3: #{tpu_custom_call.1} parent=1 // pred_check_branch
      %18 = sbr.rel (0) target = $region5
    $region4: #{tpu_custom_call.1} parent=1 // pred_region
      %20 = vsyncadd [#allocation3], 0
      %s22 = sshll.u32 %s0, 4
      %s23 = int_to_ptr.hbm [resolvable:$true] %s22
      %s24 = sshll.u32 [#allocation2], 4
      %s25 = int_to_ptr.vmem [resolvable:$true] %s24
      %27 = dma.hbm_to_vmem [thread:$0]  %s23, 1536, %s25, [#allocation3]
    $region5: #{tpu_custom_call.1} parent=1 // pred_fallthru
      _
    // Predicated region
    $region6: #{tpu_custom_call.1} parent=1 // pred_check
      _
    $region7: #{tpu_custom_call.1} parent=1 // pred_check_branch
      %29 = sbr.rel (0) target = $region9
    $region8: #{tpu_custom_call.1} parent=1 // pred_region
      %31 = vsyncadd [#allocation6], 0
      %s32 = sshll.u32 %s1, 4
      %s33 = int_to_ptr.hbm [resolvable:$true] %s32
      %s34 = sshll.u32 [#allocation5], 4
      %s35 = int_to_ptr.vmem [resolvable:$true] %s34
      %40 = dma.hbm_to_vmem [thread:$0]  %s33, 49152, %s35, [#allocation6], 128, 128, 8
    $region9: #{tpu_custom_call.1} parent=1 // pred_fallthru
      _
    // Predicated region
    $region10: #{tpu_custom_call.1} parent=1 // pred_check
      _
    $region11: #{tpu_custom_call.1} parent=1 // pred_check_branch
      %42 = sbr.rel (0) target = $region13
    $region12: #{tpu_custom_call.1} parent=1 // pred_region
      %44 = vsyncadd [#allocation6], 0
      %s46 = sshll.u32 %s2, 4
      %s47 = int_to_ptr.hbm [resolvable:$true] %s46
      %s48 = sshll.u32 [#allocation7], 4
      %s49 = int_to_ptr.vmem [resolvable:$true] %s48
      %51 = dma.hbm_to_vmem [thread:$0]  %s47, 32, %s49, [#allocation6]
    $region13: #{tpu_custom_call.1} parent=1 // pred_fallthru
      _
    // Predicated region
    $region14: #{tpu_custom_call.1} parent=1 // pred_check
      _
    $region15: #{tpu_custom_call.1} parent=1 // pred_check_branch
      %53 = sbr.rel (0) target = $region17
    $region16: #{tpu_custom_call.1} parent=1 // pred_region
      %55 = vsyncadd [#allocation9], 0
      %s56 = sshll.u32 %s3, 4
      %s57 = int_to_ptr.hbm [resolvable:$true] %s56
      %s58 = sshll.u32 [#allocation8], 4
      %s59 = int_to_ptr.vmem [resolvable:$true] %s58
      %64 = dma.hbm_to_vmem [thread:$0]  %s57, 4096, %s59, [#allocation9], 128, 128, 8
    $region17: #{tpu_custom_call.1} parent=1 // pred_fallthru
      _
    // Predicated region
    $region18: #{tpu_custom_call.1} parent=1 // pred_check
      _
    $region19: #{tpu_custom_call.1} parent=1 // pred_check_branch
      %66 = sbr.rel (0) target = $region21
    $region20: #{tpu_custom_call.1} parent=1 // pred_region
      %68 = vsyncadd [#allocation9], 0
      %s70 = sshll.u32 %s4, 4
      %s71 = int_to_ptr.hbm [resolvable:$true] %s70
      %s72 = sshll.u32 [#allocation10], 4
      %s73 = int_to_ptr.vmem [resolvable:$true] %s72
      %75 = dma.hbm_to_vmem [thread:$0]  %s71, 32, %s73, [#allocation9]
    $region21: #{tpu_custom_call.1} parent=1 // pred_fallthru
      _
    // Predicated region
    $region22: #{tpu_custom_call.1} parent=1 // pred_check
      _
    $region23: #{tpu_custom_call.1} parent=1 // pred_check_branch
      %77 = sbr.rel (0) target = $region25
    $region24: #{tpu_custom_call.1} parent=1 // pred_region
      %79 = vsyncadd [#allocation12], 0
      %s80 = sshll.u32 %s5, 4
      %s81 = int_to_ptr.hbm [resolvable:$true] %s80
      %s82 = sshll.u32 [#allocation11], 4
      %s83 = int_to_ptr.vmem [resolvable:$true] %s82
      %88 = dma.hbm_to_vmem [thread:$0]  %s81, 2048, %s83, [#allocation12], 64, 64, 4
    $region25: #{tpu_custom_call.1} parent=1 // pred_fallthru
      _
    // Predicated region
    $region26: #{tpu_custom_call.1} parent=1 // pred_check
      _
    $region27: #{tpu_custom_call.1} parent=1 // pred_check_branch
      %90 = sbr.rel (0) target = $region29
    $region28: #{tpu_custom_call.1} parent=1 // pred_region
      %92 = vsyncadd [#allocation12], 0
      %s94 = sshll.u32 %s6, 4
      %s95 = int_to_ptr.hbm [resolvable:$true] %s94
      %s96 = sshll.u32 [#allocation13], 4
      %s97 = int_to_ptr.vmem [resolvable:$true] %s96
      %99 = dma.hbm_to_vmem [thread:$0]  %s95, 16, %s97, [#allocation12]
    $region29: #{tpu_custom_call.1} parent=1 // pred_fallthru
      _
    // Predicated region
    $region30: #{tpu_custom_call.1} parent=1 // pred_check
      _
    $region31: #{tpu_custom_call.1} parent=1 // pred_check_branch
      %101 = sbr.rel (0) target = $region33
    $region32: #{tpu_custom_call.1} parent=1 // pred_region
      %103 = dma.done [#allocation3], 1536
    $region33: #{tpu_custom_call.1} parent=1 // pred_fallthru
      _
    // Predicated region
    $region34: #{tpu_custom_call.1} parent=1 // pred_check
      _
    $region35: #{tpu_custom_call.1} parent=1 // pred_check_branch
      %105 = sbr.rel (0) target = $region37
    $region36: #{tpu_custom_call.1} parent=1 // pred_region
      %107 = dma.done [#allocation6], 49152
    $region37: #{tpu_custom_call.1} parent=1 // pred_fallthru
      _
    // Predicated region
    $region38: #{tpu_custom_call.1} parent=1 // pred_check
      _
    $region39: #{tpu_custom_call.1} parent=1 // pred_check_branch
      %109 = sbr.rel (0) target = $region41
    $region40: #{tpu_custom_call.1} parent=1 // pred_region
      %111 = dma.done [#allocation6], 32
    $region41: #{tpu_custom_call.1} parent=1 // pred_fallthru
      _
    // Predicated region
    $region42: #{tpu_custom_call.1} parent=1 // pred_check
      _
    $region43: #{tpu_custom_call.1} parent=1 // pred_check_branch
      %113 = sbr.rel (0) target = $region45
    $region44: #{tpu_custom_call.1} parent=1 // pred_region
      %115 = dma.done [#allocation9], 4096
    $region45: #{tpu_custom_call.1} parent=1 // pred_fallthru
      _
    // Predicated region
    $region46: #{tpu_custom_call.1} parent=1 // pred_check
      _
    $region47: #{tpu_custom_call.1} parent=1 // pred_check_branch
      %117 = sbr.rel (0) target = $region49
    $region48: #{tpu_custom_call.1} parent=1 // pred_region
      %119 = dma.done [#allocation9], 32
    $region49: #{tpu_custom_call.1} parent=1 // pred_fallthru
      _
    // Predicated region
    $region50: #{tpu_custom_call.1} parent=1 // pred_check
      _
    $region51: #{tpu_custom_call.1} parent=1 // pred_check_branch
      %121 = sbr.rel (0) target = $region53
    $region52: #{tpu_custom_call.1} parent=1 // pred_region
      %123 = dma.done [#allocation12], 2048
    $region53: #{tpu_custom_call.1} parent=1 // pred_fallthru
      _
    // Predicated region
    $region54: #{tpu_custom_call.1} parent=1 // pred_check
      _
    $region55: #{tpu_custom_call.1} parent=1 // pred_check_branch
      %125 = sbr.rel (0) target = $region57
    $region56: #{tpu_custom_call.1} parent=1 // pred_region
      %127 = dma.done [#allocation12], 16
    $region57: #{tpu_custom_call.1} parent=1 // pred_fallthru
      _
    %v128 = vld [vmem:[#allocation2] sm:$0xff]
    %v129 = vld [vmem:[#allocation2 + $0x8] sm:$0xff]
    %v130 = vld [vmem:[#allocation2 + $0x10] sm:$0xff]
    %v131 = vld [vmem:[#allocation2 + $0x18] sm:$0xff]
    %v132 = vld [vmem:[#allocation2 + $0x20] sm:$0xff]
    %v133 = vld [vmem:[#allocation2 + $0x28] sm:$0xff]
    %v134 = vld [vmem:[#allocation2 + $0x30] sm:$0xff]
    %v135 = vld [vmem:[#allocation2 + $0x38] sm:$0xff]
    %v136 = vld [vmem:[#allocation2 + $0x40] sm:$0xff]
    %v137 = vld [vmem:[#allocation2 + $0x48] sm:$0xff]
    %v138 = vld [vmem:[#allocation2 + $0x50] sm:$0xff]
    %v139 = vld [vmem:[#allocation2 + $0x58] sm:$0xff]
    %v140 = vld [vmem:[#allocation5] sm:$0xff]
    %v141 = vld [vmem:[#allocation5 + $0x8] sm:$0xff]
    %v142 = vld [vmem:[#allocation5 + $0x10] sm:$0xff]
    %v143 = vld [vmem:[#allocation5 + $0x18] sm:$0xff]
    %v144 = vld [vmem:[#allocation5 + $0x20] sm:$0xff]
    %v145 = vld [vmem:[#allocation5 + $0x28] sm:$0xff]
    %v146 = vld [vmem:[#allocation5 + $0x30] sm:$0xff]
    %v147 = vld [vmem:[#allocation5 + $0x38] sm:$0xff]
    %v148 = vld [vmem:[#allocation5 + $0x40] sm:$0xff]
    %v149 = vld [vmem:[#allocation5 + $0x48] sm:$0xff]
    %v150 = vld [vmem:[#allocation5 + $0x50] sm:$0xff]
    %v151 = vld [vmem:[#allocation5 + $0x58] sm:$0xff]
    %v152 = vld [vmem:[#allocation5 + $0x60] sm:$0xff]
    %v153 = vld [vmem:[#allocation5 + $0x68] sm:$0xff]
    %v154 = vld [vmem:[#allocation5 + $0x70] sm:$0xff]
    %v155 = vld [vmem:[#allocation5 + $0x78] sm:$0xff]
    %v156 = vld [vmem:[#allocation5 + $0x80] sm:$0xff]
    %v157 = vld [vmem:[#allocation5 + $0x88] sm:$0xff]
    %v158 = vld [vmem:[#allocation5 + $0x90] sm:$0xff]
    %v159 = vld [vmem:[#allocation5 + $0x98] sm:$0xff]
    %v160 = vld [vmem:[#allocation5 + $0xa0] sm:$0xff]
    %v161 = vld [vmem:[#allocation5 + $0xa8] sm:$0xff]
    %v162 = vld [vmem:[#allocation5 + $0xb0] sm:$0xff]
    %v163 = vld [vmem:[#allocation5 + $0xb8] sm:$0xff]
    %v164 = vld [vmem:[#allocation5 + $0xc0] sm:$0xff]
    %v165 = vld [vmem:[#allocation5 + $0xc8] sm:$0xff]
    %v166 = vld [vmem:[#allocation5 + $0xd0] sm:$0xff]
    %v167 = vld [vmem:[#allocation5 + $0xd8] sm:$0xff]
    %v168 = vld [vmem:[#allocation5 + $0xe0] sm:$0xff]
    %v169 = vld [vmem:[#allocation5 + $0xe8] sm:$0xff]
    %v170 = vld [vmem:[#allocation5 + $0xf0] sm:$0xff]
    %v171 = vld [vmem:[#allocation5 + $0xf8] sm:$0xff]
    %v172 = vld [vmem:[#allocation5 + $0x100] sm:$0xff]
    %v173 = vld [vmem:[#allocation5 + $0x108] sm:$0xff]
    %v174 = vld [vmem:[#allocation5 + $0x110] sm:$0xff]
    %v175 = vld [vmem:[#allocation5 + $0x118] sm:$0xff]
    %v176 = vld [vmem:[#allocation5 + $0x120] sm:$0xff]
    %v177 = vld [vmem:[#allocation5 + $0x128] sm:$0xff]
    %v178 = vld [vmem:[#allocation5 + $0x130] sm:$0xff]
    %v179 = vld [vmem:[#allocation5 + $0x138] sm:$0xff]
    %v180 = vld [vmem:[#allocation5 + $0x140] sm:$0xff]
    %v181 = vld [vmem:[#allocation5 + $0x148] sm:$0xff]
    %v182 = vld [vmem:[#allocation5 + $0x150] sm:$0xff]
    %v183 = vld [vmem:[#allocation5 + $0x158] sm:$0xff]
    %v184 = vld [vmem:[#allocation5 + $0x160] sm:$0xff]
    %v185 = vld [vmem:[#allocation5 + $0x168] sm:$0xff]
    %v186 = vld [vmem:[#allocation5 + $0x170] sm:$0xff]
    %v187 = vld [vmem:[#allocation5 + $0x178] sm:$0xff]
    %v188 = vld [vmem:[#allocation5 + $0x180] sm:$0xff]
    %v189 = vld [vmem:[#allocation5 + $0x188] sm:$0xff]
    %v190 = vld [vmem:[#allocation5 + $0x190] sm:$0xff]
    %v191 = vld [vmem:[#allocation5 + $0x198] sm:$0xff]
    %v192 = vld [vmem:[#allocation5 + $0x1a0] sm:$0xff]
    %v193 = vld [vmem:[#allocation5 + $0x1a8] sm:$0xff]
    %v194 = vld [vmem:[#allocation5 + $0x1b0] sm:$0xff]
    %v195 = vld [vmem:[#allocation5 + $0x1b8] sm:$0xff]
    %v196 = vld [vmem:[#allocation5 + $0x1c0] sm:$0xff]
    %v197 = vld [vmem:[#allocation5 + $0x1c8] sm:$0xff]
    %v198 = vld [vmem:[#allocation5 + $0x1d0] sm:$0xff]
    %v199 = vld [vmem:[#allocation5 + $0x1d8] sm:$0xff]
    %v200 = vld [vmem:[#allocation5 + $0x1e0] sm:$0xff]
    %v201 = vld [vmem:[#allocation5 + $0x1e8] sm:$0xff]
    %v202 = vld [vmem:[#allocation5 + $0x1f0] sm:$0xff]
    %v203 = vld [vmem:[#allocation5 + $0x1f8] sm:$0xff]
    %v204 = vld [vmem:[#allocation5 + $0x200] sm:$0xff]
    %v205 = vld [vmem:[#allocation5 + $0x208] sm:$0xff]
    %v206 = vld [vmem:[#allocation5 + $0x210] sm:$0xff]
    %v207 = vld [vmem:[#allocation5 + $0x218] sm:$0xff]
    %v208 = vld [vmem:[#allocation5 + $0x220] sm:$0xff]
    %v209 = vld [vmem:[#allocation5 + $0x228] sm:$0xff]
    %v210 = vld [vmem:[#allocation5 + $0x230] sm:$0xff]
    %v211 = vld [vmem:[#allocation5 + $0x238] sm:$0xff]
    %v212 = vld [vmem:[#allocation5 + $0x240] sm:$0xff]
    %v213 = vld [vmem:[#allocation5 + $0x248] sm:$0xff]
    %v214 = vld [vmem:[#allocation5 + $0x250] sm:$0xff]
    %v215 = vld [vmem:[#allocation5 + $0x258] sm:$0xff]
    %v216 = vld [vmem:[#allocation5 + $0x260] sm:$0xff]
    %v217 = vld [vmem:[#allocation5 + $0x268] sm:$0xff]
    %v218 = vld [vmem:[#allocation5 + $0x270] sm:$0xff]
    %v219 = vld [vmem:[#allocation5 + $0x278] sm:$0xff]
    %v220 = vld [vmem:[#allocation5 + $0x280] sm:$0xff]
    %v221 = vld [vmem:[#allocation5 + $0x288] sm:$0xff]
    %v222 = vld [vmem:[#allocation5 + $0x290] sm:$0xff]
    %v223 = vld [vmem:[#allocation5 + $0x298] sm:$0xff]
    %v224 = vld [vmem:[#allocation5 + $0x2a0] sm:$0xff]
    %v225 = vld [vmem:[#allocation5 + $0x2a8] sm:$0xff]
    %v226 = vld [vmem:[#allocation5 + $0x2b0] sm:$0xff]
    %v227 = vld [vmem:[#allocation5 + $0x2b8] sm:$0xff]
    %v228 = vld [vmem:[#allocation5 + $0x2c0] sm:$0xff]
    %v229 = vld [vmem:[#allocation5 + $0x2c8] sm:$0xff]
    %v230 = vld [vmem:[#allocation5 + $0x2d0] sm:$0xff]
    %v231 = vld [vmem:[#allocation5 + $0x2d8] sm:$0xff]
    %v232 = vld [vmem:[#allocation5 + $0x2e0] sm:$0xff]
    %v233 = vld [vmem:[#allocation5 + $0x2e8] sm:$0xff]
    %v234 = vld [vmem:[#allocation5 + $0x2f0] sm:$0xff]
    %v235 = vld [vmem:[#allocation5 + $0x2f8] sm:$0xff]
    %v236 = vld [vmem:[#allocation5 + $0x300] sm:$0xff]
    %v237 = vld [vmem:[#allocation5 + $0x308] sm:$0xff]
    %v238 = vld [vmem:[#allocation5 + $0x310] sm:$0xff]
    %v239 = vld [vmem:[#allocation5 + $0x318] sm:$0xff]
    %v240 = vld [vmem:[#allocation5 + $0x320] sm:$0xff]
    %v241 = vld [vmem:[#allocation5 + $0x328] sm:$0xff]
    %v242 = vld [vmem:[#allocation5 + $0x330] sm:$0xff]
    %v243 = vld [vmem:[#allocation5 + $0x338] sm:$0xff]
    %v244 = vld [vmem:[#allocation5 + $0x340] sm:$0xff]
    %v245 = vld [vmem:[#allocation5 + $0x348] sm:$0xff]
    %v246 = vld [vmem:[#allocation5 + $0x350] sm:$0xff]
    %v247 = vld [vmem:[#allocation5 + $0x358] sm:$0xff]
    %v248 = vld [vmem:[#allocation5 + $0x360] sm:$0xff]
    %v249 = vld [vmem:[#allocation5 + $0x368] sm:$0xff]
    %v250 = vld [vmem:[#allocation5 + $0x370] sm:$0xff]
    %v251 = vld [vmem:[#allocation5 + $0x378] sm:$0xff]
    %v252 = vld [vmem:[#allocation5 + $0x380] sm:$0xff]
    %v253 = vld [vmem:[#allocation5 + $0x388] sm:$0xff]
    %v254 = vld [vmem:[#allocation5 + $0x390] sm:$0xff]
    %v255 = vld [vmem:[#allocation5 + $0x398] sm:$0xff]
    %v256 = vld [vmem:[#allocation5 + $0x3a0] sm:$0xff]
    %v257 = vld [vmem:[#allocation5 + $0x3a8] sm:$0xff]
    %v258 = vld [vmem:[#allocation5 + $0x3b0] sm:$0xff]
    %v259 = vld [vmem:[#allocation5 + $0x3b8] sm:$0xff]
    %v260 = vld [vmem:[#allocation5 + $0x3c0] sm:$0xff]
    %v261 = vld [vmem:[#allocation5 + $0x3c8] sm:$0xff]
    %v262 = vld [vmem:[#allocation5 + $0x3d0] sm:$0xff]
    %v263 = vld [vmem:[#allocation5 + $0x3d8] sm:$0xff]
    %v264 = vld [vmem:[#allocation5 + $0x3e0] sm:$0xff]
    %v265 = vld [vmem:[#allocation5 + $0x3e8] sm:$0xff]
    %v266 = vld [vmem:[#allocation5 + $0x3f0] sm:$0xff]
    %v267 = vld [vmem:[#allocation5 + $0x3f8] sm:$0xff]
    %v268 = vld [vmem:[#allocation5 + $0x400] sm:$0xff]
    %v269 = vld [vmem:[#allocation5 + $0x408] sm:$0xff]
    %v270 = vld [vmem:[#allocation5 + $0x410] sm:$0xff]
    %v271 = vld [vmem:[#allocation5 + $0x418] sm:$0xff]
    %v272 = vld [vmem:[#allocation5 + $0x420] sm:$0xff]
    %v273 = vld [vmem:[#allocation5 + $0x428] sm:$0xff]
    %v274 = vld [vmem:[#allocation5 + $0x430] sm:$0xff]
    %v275 = vld [vmem:[#allocation5 + $0x438] sm:$0xff]
    %v276 = vld [vmem:[#allocation5 + $0x440] sm:$0xff]
    %v277 = vld [vmem:[#allocation5 + $0x448] sm:$0xff]
    %v278 = vld [vmem:[#allocation5 + $0x450] sm:$0xff]
    %v279 = vld [vmem:[#allocation5 + $0x458] sm:$0xff]
    %v280 = vld [vmem:[#allocation5 + $0x460] sm:$0xff]
    %v281 = vld [vmem:[#allocation5 + $0x468] sm:$0xff]
    %v282 = vld [vmem:[#allocation5 + $0x470] sm:$0xff]
    %v283 = vld [vmem:[#allocation5 + $0x478] sm:$0xff]
    %v284 = vld [vmem:[#allocation5 + $0x480] sm:$0xff]
    %v285 = vld [vmem:[#allocation5 + $0x488] sm:$0xff]
    %v286 = vld [vmem:[#allocation5 + $0x490] sm:$0xff]
    %v287 = vld [vmem:[#allocation5 + $0x498] sm:$0xff]
    %v288 = vld [vmem:[#allocation5 + $0x4a0] sm:$0xff]
    %v289 = vld [vmem:[#allocation5 + $0x4a8] sm:$0xff]
    %v290 = vld [vmem:[#allocation5 + $0x4b0] sm:$0xff]
    %v291 = vld [vmem:[#allocation5 + $0x4b8] sm:$0xff]
    %v292 = vld [vmem:[#allocation5 + $0x4c0] sm:$0xff]
    %v293 = vld [vmem:[#allocation5 + $0x4c8] sm:$0xff]
    %v294 = vld [vmem:[#allocation5 + $0x4d0] sm:$0xff]
    %v295 = vld [vmem:[#allocation5 + $0x4d8] sm:$0xff]
    %v296 = vld [vmem:[#allocation5 + $0x4e0] sm:$0xff]
    %v297 = vld [vmem:[#allocation5 + $0x4e8] sm:$0xff]
    %v298 = vld [vmem:[#allocation5 + $0x4f0] sm:$0xff]
    %v299 = vld [vmem:[#allocation5 + $0x4f8] sm:$0xff]
    %v300 = vld [vmem:[#allocation5 + $0x500] sm:$0xff]
    %v301 = vld [vmem:[#allocation5 + $0x508] sm:$0xff]
    %v302 = vld [vmem:[#allocation5 + $0x510] sm:$0xff]
    %v303 = vld [vmem:[#allocation5 + $0x518] sm:$0xff]
    %v304 = vld [vmem:[#allocation5 + $0x520] sm:$0xff]
    %v305 = vld [vmem:[#allocation5 + $0x528] sm:$0xff]
    %v306 = vld [vmem:[#allocation5 + $0x530] sm:$0xff]
    %v307 = vld [vmem:[#allocation5 + $0x538] sm:$0xff]
    %v308 = vld [vmem:[#allocation5 + $0x540] sm:$0xff]
    %v309 = vld [vmem:[#allocation5 + $0x548] sm:$0xff]
    %v310 = vld [vmem:[#allocation5 + $0x550] sm:$0xff]
    %v311 = vld [vmem:[#allocation5 + $0x558] sm:$0xff]
    %v312 = vld [vmem:[#allocation5 + $0x560] sm:$0xff]
    %v313 = vld [vmem:[#allocation5 + $0x568] sm:$0xff]
    %v314 = vld [vmem:[#allocation5 + $0x570] sm:$0xff]
    %v315 = vld [vmem:[#allocation5 + $0x578] sm:$0xff]
    %v316 = vld [vmem:[#allocation5 + $0x580] sm:$0xff]
    %v317 = vld [vmem:[#allocation5 + $0x588] sm:$0xff]
    %v318 = vld [vmem:[#allocation5 + $0x590] sm:$0xff]
    %v319 = vld [vmem:[#allocation5 + $0x598] sm:$0xff]
    %v320 = vld [vmem:[#allocation5 + $0x5a0] sm:$0xff]
    %v321 = vld [vmem:[#allocation5 + $0x5a8] sm:$0xff]
    %v322 = vld [vmem:[#allocation5 + $0x5b0] sm:$0xff]
    %v323 = vld [vmem:[#allocation5 + $0x5b8] sm:$0xff]
    %v324 = vld [vmem:[#allocation5 + $0x5c0] sm:$0xff]
    %v325 = vld [vmem:[#allocation5 + $0x5c8] sm:$0xff]
    %v326 = vld [vmem:[#allocation5 + $0x5d0] sm:$0xff]
    %v327 = vld [vmem:[#allocation5 + $0x5d8] sm:$0xff]
    %v328 = vld [vmem:[#allocation5 + $0x5e0] sm:$0xff]
    %v329 = vld [vmem:[#allocation5 + $0x5e8] sm:$0xff]
    %v330 = vld [vmem:[#allocation5 + $0x5f0] sm:$0xff]
    %v331 = vld [vmem:[#allocation5 + $0x5f8] sm:$0xff]
    %v332 = vld [vmem:[#allocation5 + $0x600] sm:$0xff]
    %v333 = vld [vmem:[#allocation5 + $0x608] sm:$0xff]
    %v334 = vld [vmem:[#allocation5 + $0x610] sm:$0xff]
    %v335 = vld [vmem:[#allocation5 + $0x618] sm:$0xff]
    %v336 = vld [vmem:[#allocation5 + $0x620] sm:$0xff]
    %v337 = vld [vmem:[#allocation5 + $0x628] sm:$0xff]
    %v338 = vld [vmem:[#allocation5 + $0x630] sm:$0xff]
    %v339 = vld [vmem:[#allocation5 + $0x638] sm:$0xff]
    %v340 = vld [vmem:[#allocation5 + $0x640] sm:$0xff]
    %v341 = vld [vmem:[#allocation5 + $0x648] sm:$0xff]
    %v342 = vld [vmem:[#allocation5 + $0x650] sm:$0xff]
    %v343 = vld [vmem:[#allocation5 + $0x658] sm:$0xff]
    %v344 = vld [vmem:[#allocation5 + $0x660] sm:$0xff]
    %v345 = vld [vmem:[#allocation5 + $0x668] sm:$0xff]
    %v346 = vld [vmem:[#allocation5 + $0x670] sm:$0xff]
    %v347 = vld [vmem:[#allocation5 + $0x678] sm:$0xff]
    %v348 = vld [vmem:[#allocation5 + $0x680] sm:$0xff]
    %v349 = vld [vmem:[#allocation5 + $0x688] sm:$0xff]
    %v350 = vld [vmem:[#allocation5 + $0x690] sm:$0xff]
    %v351 = vld [vmem:[#allocation5 + $0x698] sm:$0xff]
    %v352 = vld [vmem:[#allocation5 + $0x6a0] sm:$0xff]
    %v353 = vld [vmem:[#allocation5 + $0x6a8] sm:$0xff]
    %v354 = vld [vmem:[#allocation5 + $0x6b0] sm:$0xff]
    %v355 = vld [vmem:[#allocation5 + $0x6b8] sm:$0xff]
    %v356 = vld [vmem:[#allocation5 + $0x6c0] sm:$0xff]
    %v357 = vld [vmem:[#allocation5 + $0x6c8] sm:$0xff]
    %v358 = vld [vmem:[#allocation5 + $0x6d0] sm:$0xff]
    %v359 = vld [vmem:[#allocation5 + $0x6d8] sm:$0xff]
    %v360 = vld [vmem:[#allocation5 + $0x6e0] sm:$0xff]
    %v361 = vld [vmem:[#allocation5 + $0x6e8] sm:$0xff]
    %v362 = vld [vmem:[#allocation5 + $0x6f0] sm:$0xff]
    %v363 = vld [vmem:[#allocation5 + $0x6f8] sm:$0xff]
    %v364 = vld [vmem:[#allocation5 + $0x700] sm:$0xff]
    %v365 = vld [vmem:[#allocation5 + $0x708] sm:$0xff]
    %v366 = vld [vmem:[#allocation5 + $0x710] sm:$0xff]
    %v367 = vld [vmem:[#allocation5 + $0x718] sm:$0xff]
    %v368 = vld [vmem:[#allocation5 + $0x720] sm:$0xff]
    %v369 = vld [vmem:[#allocation5 + $0x728] sm:$0xff]
    %v370 = vld [vmem:[#allocation5 + $0x730] sm:$0xff]
    %v371 = vld [vmem:[#allocation5 + $0x738] sm:$0xff]
    %v372 = vld [vmem:[#allocation5 + $0x740] sm:$0xff]
    %v373 = vld [vmem:[#allocation5 + $0x748] sm:$0xff]
    %v374 = vld [vmem:[#allocation5 + $0x750] sm:$0xff]
    %v375 = vld [vmem:[#allocation5 + $0x758] sm:$0xff]
    %v376 = vld [vmem:[#allocation5 + $0x760] sm:$0xff]
    %v377 = vld [vmem:[#allocation5 + $0x768] sm:$0xff]
    %v378 = vld [vmem:[#allocation5 + $0x770] sm:$0xff]
    %v379 = vld [vmem:[#allocation5 + $0x778] sm:$0xff]
    %v380 = vld [vmem:[#allocation5 + $0x780] sm:$0xff]
    %v381 = vld [vmem:[#allocation5 + $0x788] sm:$0xff]
    %v382 = vld [vmem:[#allocation5 + $0x790] sm:$0xff]
    %v383 = vld [vmem:[#allocation5 + $0x798] sm:$0xff]
    %v384 = vld [vmem:[#allocation5 + $0x7a0] sm:$0xff]
    %v385 = vld [vmem:[#allocation5 + $0x7a8] sm:$0xff]
    %v386 = vld [vmem:[#allocation5 + $0x7b0] sm:$0xff]
    %v387 = vld [vmem:[#allocation5 + $0x7b8] sm:$0xff]
    %v388 = vld [vmem:[#allocation5 + $0x7c0] sm:$0xff]
    %v389 = vld [vmem:[#allocation5 + $0x7c8] sm:$0xff]
    %v390 = vld [vmem:[#allocation5 + $0x7d0] sm:$0xff]
    %v391 = vld [vmem:[#allocation5 + $0x7d8] sm:$0xff]
    %v392 = vld [vmem:[#allocation5 + $0x7e0] sm:$0xff]
    %v393 = vld [vmem:[#allocation5 + $0x7e8] sm:$0xff]
    %v394 = vld [vmem:[#allocation5 + $0x7f0] sm:$0xff]
    %v395 = vld [vmem:[#allocation5 + $0x7f8] sm:$0xff]
    %v396 = vld [vmem:[#allocation5 + $0x800] sm:$0xff]
    %v397 = vld [vmem:[#allocation5 + $0x808] sm:$0xff]
    %v398 = vld [vmem:[#allocation5 + $0x810] sm:$0xff]
    %v399 = vld [vmem:[#allocation5 + $0x818] sm:$0xff]
    %v400 = vld [vmem:[#allocation5 + $0x820] sm:$0xff]
    %v401 = vld [vmem:[#allocation5 + $0x828] sm:$0xff]
    %v402 = vld [vmem:[#allocation5 + $0x830] sm:$0xff]
    %v403 = vld [vmem:[#allocation5 + $0x838] sm:$0xff]
    %v404 = vld [vmem:[#allocation5 + $0x840] sm:$0xff]
    %v405 = vld [vmem:[#allocation5 + $0x848] sm:$0xff]
    %v406 = vld [vmem:[#allocation5 + $0x850] sm:$0xff]
    %v407 = vld [vmem:[#allocation5 + $0x858] sm:$0xff]
    %v408 = vld [vmem:[#allocation5 + $0x860] sm:$0xff]
    %v409 = vld [vmem:[#allocation5 + $0x868] sm:$0xff]
    %v410 = vld [vmem:[#allocation5 + $0x870] sm:$0xff]
    %v411 = vld [vmem:[#allocation5 + $0x878] sm:$0xff]
    %v412 = vld [vmem:[#allocation5 + $0x880] sm:$0xff]
    %v413 = vld [vmem:[#allocation5 + $0x888] sm:$0xff]
    %v414 = vld [vmem:[#allocation5 + $0x890] sm:$0xff]
    %v415 = vld [vmem:[#allocation5 + $0x898] sm:$0xff]
    %v416 = vld [vmem:[#allocation5 + $0x8a0] sm:$0xff]
    %v417 = vld [vmem:[#allocation5 + $0x8a8] sm:$0xff]
    %v418 = vld [vmem:[#allocation5 + $0x8b0] sm:$0xff]
    %v419 = vld [vmem:[#allocation5 + $0x8b8] sm:$0xff]
    %v420 = vld [vmem:[#allocation5 + $0x8c0] sm:$0xff]
    %v421 = vld [vmem:[#allocation5 + $0x8c8] sm:$0xff]
    %v422 = vld [vmem:[#allocation5 + $0x8d0] sm:$0xff]
    %v423 = vld [vmem:[#allocation5 + $0x8d8] sm:$0xff]
    %v424 = vld [vmem:[#allocation5 + $0x8e0] sm:$0xff]
    %v425 = vld [vmem:[#allocation5 + $0x8e8] sm:$0xff]
    %v426 = vld [vmem:[#allocation5 + $0x8f0] sm:$0xff]
    %v427 = vld [vmem:[#allocation5 + $0x8f8] sm:$0xff]
    %v428 = vld [vmem:[#allocation5 + $0x900] sm:$0xff]
    %v429 = vld [vmem:[#allocation5 + $0x908] sm:$0xff]
    %v430 = vld [vmem:[#allocation5 + $0x910] sm:$0xff]
    %v431 = vld [vmem:[#allocation5 + $0x918] sm:$0xff]
    %v432 = vld [vmem:[#allocation5 + $0x920] sm:$0xff]
    %v433 = vld [vmem:[#allocation5 + $0x928] sm:$0xff]
    %v434 = vld [vmem:[#allocation5 + $0x930] sm:$0xff]
    %v435 = vld [vmem:[#allocation5 + $0x938] sm:$0xff]
    %v436 = vld [vmem:[#allocation5 + $0x940] sm:$0xff]
    %v437 = vld [vmem:[#allocation5 + $0x948] sm:$0xff]
    %v438 = vld [vmem:[#allocation5 + $0x950] sm:$0xff]
    %v439 = vld [vmem:[#allocation5 + $0x958] sm:$0xff]
    %v440 = vld [vmem:[#allocation5 + $0x960] sm:$0xff]
    %v441 = vld [vmem:[#allocation5 + $0x968] sm:$0xff]
    %v442 = vld [vmem:[#allocation5 + $0x970] sm:$0xff]
    %v443 = vld [vmem:[#allocation5 + $0x978] sm:$0xff]
    %v444 = vld [vmem:[#allocation5 + $0x980] sm:$0xff]
    %v445 = vld [vmem:[#allocation5 + $0x988] sm:$0xff]
    %v446 = vld [vmem:[#allocation5 + $0x990] sm:$0xff]
    %v447 = vld [vmem:[#allocation5 + $0x998] sm:$0xff]
    %v448 = vld [vmem:[#allocation5 + $0x9a0] sm:$0xff]
    %v449 = vld [vmem:[#allocation5 + $0x9a8] sm:$0xff]
    %v450 = vld [vmem:[#allocation5 + $0x9b0] sm:$0xff]
    %v451 = vld [vmem:[#allocation5 + $0x9b8] sm:$0xff]
    %v452 = vld [vmem:[#allocation5 + $0x9c0] sm:$0xff]
    %v453 = vld [vmem:[#allocation5 + $0x9c8] sm:$0xff]
    %v454 = vld [vmem:[#allocation5 + $0x9d0] sm:$0xff]
    %v455 = vld [vmem:[#allocation5 + $0x9d8] sm:$0xff]
    %v456 = vld [vmem:[#allocation5 + $0x9e0] sm:$0xff]
    %v457 = vld [vmem:[#allocation5 + $0x9e8] sm:$0xff]
    %v458 = vld [vmem:[#allocation5 + $0x9f0] sm:$0xff]
    %v459 = vld [vmem:[#allocation5 + $0x9f8] sm:$0xff]
    %v460 = vld [vmem:[#allocation5 + $0xa00] sm:$0xff]
    %v461 = vld [vmem:[#allocation5 + $0xa08] sm:$0xff]
    %v462 = vld [vmem:[#allocation5 + $0xa10] sm:$0xff]
    %v463 = vld [vmem:[#allocation5 + $0xa18] sm:$0xff]
    %v464 = vld [vmem:[#allocation5 + $0xa20] sm:$0xff]
    %v465 = vld [vmem:[#allocation5 + $0xa28] sm:$0xff]
    %v466 = vld [vmem:[#allocation5 + $0xa30] sm:$0xff]
    %v467 = vld [vmem:[#allocation5 + $0xa38] sm:$0xff]
    %v468 = vld [vmem:[#allocation5 + $0xa40] sm:$0xff]
    %v469 = vld [vmem:[#allocation5 + $0xa48] sm:$0xff]
    %v470 = vld [vmem:[#allocation5 + $0xa50] sm:$0xff]
    %v471 = vld [vmem:[#allocation5 + $0xa58] sm:$0xff]
    %v472 = vld [vmem:[#allocation5 + $0xa60] sm:$0xff]
    %v473 = vld [vmem:[#allocation5 + $0xa68] sm:$0xff]
    %v474 = vld [vmem:[#allocation5 + $0xa70] sm:$0xff]
    %v475 = vld [vmem:[#allocation5 + $0xa78] sm:$0xff]
    %v476 = vld [vmem:[#allocation5 + $0xa80] sm:$0xff]
    %v477 = vld [vmem:[#allocation5 + $0xa88] sm:$0xff]
    %v478 = vld [vmem:[#allocation5 + $0xa90] sm:$0xff]
    %v479 = vld [vmem:[#allocation5 + $0xa98] sm:$0xff]
    %v480 = vld [vmem:[#allocation5 + $0xaa0] sm:$0xff]
    %v481 = vld [vmem:[#allocation5 + $0xaa8] sm:$0xff]
    %v482 = vld [vmem:[#allocation5 + $0xab0] sm:$0xff]
    %v483 = vld [vmem:[#allocation5 + $0xab8] sm:$0xff]
    %v484 = vld [vmem:[#allocation5 + $0xac0] sm:$0xff]
    %v485 = vld [vmem:[#allocation5 + $0xac8] sm:$0xff]
    %v486 = vld [vmem:[#allocation5 + $0xad0] sm:$0xff]
    %v487 = vld [vmem:[#allocation5 + $0xad8] sm:$0xff]
    %v488 = vld [vmem:[#allocation5 + $0xae0] sm:$0xff]
    %v489 = vld [vmem:[#allocation5 + $0xae8] sm:$0xff]
    %v490 = vld [vmem:[#allocation5 + $0xaf0] sm:$0xff]
    %v491 = vld [vmem:[#allocation5 + $0xaf8] sm:$0xff]
    %v492 = vld [vmem:[#allocation5 + $0xb00] sm:$0xff]
    %v493 = vld [vmem:[#allocation5 + $0xb08] sm:$0xff]
    %v494 = vld [vmem:[#allocation5 + $0xb10] sm:$0xff]
    %v495 = vld [vmem:[#allocation5 + $0xb18] sm:$0xff]
    %v496 = vld [vmem:[#allocation5 + $0xb20] sm:$0xff]
    %v497 = vld [vmem:[#allocation5 + $0xb28] sm:$0xff]
    %v498 = vld [vmem:[#allocation5 + $0xb30] sm:$0xff]
    %v499 = vld [vmem:[#allocation5 + $0xb38] sm:$0xff]
    %v500 = vld [vmem:[#allocation5 + $0xb40] sm:$0xff]
    %v501 = vld [vmem:[#allocation5 + $0xb48] sm:$0xff]
    %v502 = vld [vmem:[#allocation5 + $0xb50] sm:$0xff]
    %v503 = vld [vmem:[#allocation5 + $0xb58] sm:$0xff]
    %v504 = vld [vmem:[#allocation5 + $0xb60] sm:$0xff]
    %v505 = vld [vmem:[#allocation5 + $0xb68] sm:$0xff]
    %v506 = vld [vmem:[#allocation5 + $0xb70] sm:$0xff]
    %v507 = vld [vmem:[#allocation5 + $0xb78] sm:$0xff]
    %v508 = vld [vmem:[#allocation5 + $0xb80] sm:$0xff]
    %v509 = vld [vmem:[#allocation5 + $0xb88] sm:$0xff]
    %v510 = vld [vmem:[#allocation5 + $0xb90] sm:$0xff]
    %v511 = vld [vmem:[#allocation5 + $0xb98] sm:$0xff]
    %v512 = vld [vmem:[#allocation5 + $0xba0] sm:$0xff]
    %v513 = vld [vmem:[#allocation5 + $0xba8] sm:$0xff]
    %v514 = vld [vmem:[#allocation5 + $0xbb0] sm:$0xff]
    %v515 = vld [vmem:[#allocation5 + $0xbb8] sm:$0xff]
    %v516 = vld [vmem:[#allocation5 + $0xbc0] sm:$0xff]
    %v517 = vld [vmem:[#allocation5 + $0xbc8] sm:$0xff]
    %v518 = vld [vmem:[#allocation5 + $0xbd0] sm:$0xff]
    %v519 = vld [vmem:[#allocation5 + $0xbd8] sm:$0xff]
    %v520 = vld [vmem:[#allocation5 + $0xbe0] sm:$0xff]
    %v521 = vld [vmem:[#allocation5 + $0xbe8] sm:$0xff]
    %v522 = vld [vmem:[#allocation5 + $0xbf0] sm:$0xff]
    %v523 = vld [vmem:[#allocation5 + $0xbf8] sm:$0xff]
    %v524 = vld [vmem:[#allocation7] sm:$0x3]
    %v526 = vperm.slane %v524, 0
    %v527 = vperm.slane %v524, 1
    %v542 = vunpack.c.l.b16 %v128
    %v543 = vunpack.c.h.b16 %v128
    %v544 = vunpack.c.l.b16 %v129
    %v545 = vunpack.c.h.b16 %v129
    %v546 = vunpack.c.l.b16 %v130
    %v547 = vunpack.c.h.b16 %v130
    %v548 = vunpack.c.l.b16 %v131
    %v549 = vunpack.c.h.b16 %v131
    %v550 = vunpack.c.l.b16 %v132
    %v551 = vunpack.c.h.b16 %v132
    %v552 = vunpack.c.l.b16 %v133
    %v553 = vunpack.c.h.b16 %v133
    %v554 = vunpack.c.l.b16 %v134
    %v555 = vunpack.c.h.b16 %v134
    %v556 = vunpack.c.l.b16 %v135
    %v557 = vunpack.c.h.b16 %v135
    %v558 = vunpack.c.l.b16 %v136
    %v559 = vunpack.c.h.b16 %v136
    %v560 = vunpack.c.l.b16 %v137
    %v561 = vunpack.c.h.b16 %v137
    %v562 = vunpack.c.l.b16 %v138
    %v563 = vunpack.c.h.b16 %v138
    %v564 = vunpack.c.l.b16 %v139
    %v565 = vunpack.c.h.b16 %v139
    %v566 = vpack.c.b16 %v542, %v542
    %v567 = vpack.c.b16 %v543, %v543
    %v568 = vpack.c.b16 %v544, %v544
    %v569 = vpack.c.b16 %v545, %v545
    %v570 = vpack.c.b16 %v546, %v546
    %v571 = vpack.c.b16 %v547, %v547
    %v572 = vpack.c.b16 %v548, %v548
    %v573 = vpack.c.b16 %v549, %v549
    %v574 = vpack.c.b16 %v550, %v550
    %v575 = vpack.c.b16 %v551, %v551
    %v576 = vpack.c.b16 %v552, %v552
    %v577 = vpack.c.b16 %v553, %v553
    %v578 = vpack.c.b16 %v554, %v554
    %v579 = vpack.c.b16 %v555, %v555
    %v580 = vpack.c.b16 %v556, %v556
    %v581 = vpack.c.b16 %v557, %v557
    %v582 = vpack.c.b16 %v558, %v558
    %v583 = vpack.c.b16 %v559, %v559
    %v584 = vpack.c.b16 %v560, %v560
    %v585 = vpack.c.b16 %v561, %v561
    %v586 = vpack.c.b16 %v562, %v562
    %v587 = vpack.c.b16 %v563, %v563
    %v588 = vpack.c.b16 %v564, %v564
    %v589 = vpack.c.b16 %v565, %v565
    %v998 = vunpack.c.l.b16 %v140
    %v999 = vunpack.c.h.b16 %v140
    %v1000 = vunpack.c.l.b16 %v141
    %v1001 = vunpack.c.h.b16 %v141
    %v1002 = vunpack.c.l.b16 %v142
    %v1003 = vunpack.c.h.b16 %v142
    %v1004 = vunpack.c.l.b16 %v143
    %v1005 = vunpack.c.h.b16 %v143
    %v1006 = vunpack.c.l.b16 %v144
    %v1007 = vunpack.c.h.b16 %v144
    %v1008 = vunpack.c.l.b16 %v145
    %v1009 = vunpack.c.h.b16 %v145
    %v1010 = vunpack.c.l.b16 %v146
    %v1011 = vunpack.c.h.b16 %v146
    %v1012 = vunpack.c.l.b16 %v147
    %v1013 = vunpack.c.h.b16 %v147
    %v1014 = vunpack.c.l.b16 %v148
    %v1015 = vunpack.c.h.b16 %v148
    %v1016 = vunpack.c.l.b16 %v149
    %v1017 = vunpack.c.h.b16 %v149
    %v1018 = vunpack.c.l.b16 %v150
    %v1019 = vunpack.c.h.b16 %v150
    %v1020 = vunpack.c.l.b16 %v151
    %v1021 = vunpack.c.h.b16 %v151
    %v1022 = vunpack.c.l.b16 %v152
    %v1023 = vunpack.c.h.b16 %v152
    %v1024 = vunpack.c.l.b16 %v153
    %v1025 = vunpack.c.h.b16 %v153
    %v1026 = vunpack.c.l.b16 %v154
    %v1027 = vunpack.c.h.b16 %v154
    %v1028 = vunpack.c.l.b16 %v155
    %v1029 = vunpack.c.h.b16 %v155
    %v1030 = vunpack.c.l.b16 %v156
    %v1031 = vunpack.c.h.b16 %v156
    %v1032 = vunpack.c.l.b16 %v157
    %v1033 = vunpack.c.h.b16 %v157
    %v1034 = vunpack.c.l.b16 %v158
    %v1035 = vunpack.c.h.b16 %v158
    %v1036 = vunpack.c.l.b16 %v159
    %v1037 = vunpack.c.h.b16 %v159
    %v1038 = vunpack.c.l.b16 %v160
    %v1039 = vunpack.c.h.b16 %v160
    %v1040 = vunpack.c.l.b16 %v161
    %v1041 = vunpack.c.h.b16 %v161
    %v1042 = vunpack.c.l.b16 %v162
    %v1043 = vunpack.c.h.b16 %v162
    %v1044 = vunpack.c.l.b16 %v163
    %v1045 = vunpack.c.h.b16 %v163
    %v1046 = vunpack.c.l.b16 %v164
    %v1047 = vunpack.c.h.b16 %v164
    %v1048 = vunpack.c.l.b16 %v165
    %v1049 = vunpack.c.h.b16 %v165
    %v1050 = vunpack.c.l.b16 %v166
    %v1051 = vunpack.c.h.b16 %v166
    %v1052 = vunpack.c.l.b16 %v167
    %v1053 = vunpack.c.h.b16 %v167
    %v1054 = vunpack.c.l.b16 %v168
    %v1055 = vunpack.c.h.b16 %v168
    %v1056 = vunpack.c.l.b16 %v169
    %v1057 = vunpack.c.h.b16 %v169
    %v1058 = vunpack.c.l.b16 %v170
    %v1059 = vunpack.c.h.b16 %v170
    %v1060 = vunpack.c.l.b16 %v171
    %v1061 = vunpack.c.h.b16 %v171
    %v1062 = vunpack.c.l.b16 %v172
    %v1063 = vunpack.c.h.b16 %v172
    %v1064 = vunpack.c.l.b16 %v173
    %v1065 = vunpack.c.h.b16 %v173
    %v1066 = vunpack.c.l.b16 %v174
    %v1067 = vunpack.c.h.b16 %v174
    %v1068 = vunpack.c.l.b16 %v175
    %v1069 = vunpack.c.h.b16 %v175
    %v1070 = vunpack.c.l.b16 %v176
    %v1071 = vunpack.c.h.b16 %v176
    %v1072 = vunpack.c.l.b16 %v177
    %v1073 = vunpack.c.h.b16 %v177
    %v1074 = vunpack.c.l.b16 %v178
    %v1075 = vunpack.c.h.b16 %v178
    %v1076 = vunpack.c.l.b16 %v179
    %v1077 = vunpack.c.h.b16 %v179
    %v1078 = vunpack.c.l.b16 %v180
    %v1079 = vunpack.c.h.b16 %v180
    %v1080 = vunpack.c.l.b16 %v181
    %v1081 = vunpack.c.h.b16 %v181
    %v1082 = vunpack.c.l.b16 %v182
    %v1083 = vunpack.c.h.b16 %v182
    %v1084 = vunpack.c.l.b16 %v183
    %v1085 = vunpack.c.h.b16 %v183
    %v1086 = vunpack.c.l.b16 %v184
    %v1087 = vunpack.c.h.b16 %v184
    %v1088 = vunpack.c.l.b16 %v185
    %v1089 = vunpack.c.h.b16 %v185
    %v1090 = vunpack.c.l.b16 %v186
    %v1091 = vunpack.c.h.b16 %v186
    %v1092 = vunpack.c.l.b16 %v187
    %v1093 = vunpack.c.h.b16 %v187
    %v1094 = vunpack.c.l.b16 %v188
    %v1095 = vunpack.c.h.b16 %v188
    %v1096 = vunpack.c.l.b16 %v189
    %v1097 = vunpack.c.h.b16 %v189
    %v1098 = vunpack.c.l.b16 %v190
    %v1099 = vunpack.c.h.b16 %v190
    %v1100 = vunpack.c.l.b16 %v191
    %v1101 = vunpack.c.h.b16 %v191
    %v1102 = vunpack.c.l.b16 %v192
    %v1103 = vunpack.c.h.b16 %v192
    %v1104 = vunpack.c.l.b16 %v193
    %v1105 = vunpack.c.h.b16 %v193
    %v1106 = vunpack.c.l.b16 %v194
    %v1107 = vunpack.c.h.b16 %v194
    %v1108 = vunpack.c.l.b16 %v195
    %v1109 = vunpack.c.h.b16 %v195
    %v1110 = vunpack.c.l.b16 %v196
    %v1111 = vunpack.c.h.b16 %v196
    %v1112 = vunpack.c.l.b16 %v197
    %v1113 = vunpack.c.h.b16 %v197
    %v1114 = vunpack.c.l.b16 %v198
    %v1115 = vunpack.c.h.b16 %v198
    %v1116 = vunpack.c.l.b16 %v199
    %v1117 = vunpack.c.h.b16 %v199
    %v1118 = vunpack.c.l.b16 %v200
    %v1119 = vunpack.c.h.b16 %v200
    %v1120 = vunpack.c.l.b16 %v201
    %v1121 = vunpack.c.h.b16 %v201
    %v1122 = vunpack.c.l.b16 %v202
    %v1123 = vunpack.c.h.b16 %v202
    %v1124 = vunpack.c.l.b16 %v203
    %v1125 = vunpack.c.h.b16 %v203
    %v1126 = vunpack.c.l.b16 %v204
    %v1127 = vunpack.c.h.b16 %v204
    %v1128 = vunpack.c.l.b16 %v205
    %v1129 = vunpack.c.h.b16 %v205
    %v1130 = vunpack.c.l.b16 %v206
    %v1131 = vunpack.c.h.b16 %v206
    %v1132 = vunpack.c.l.b16 %v207
    %v1133 = vunpack.c.h.b16 %v207
    %v1134 = vunpack.c.l.b16 %v208
    %v1135 = vunpack.c.h.b16 %v208
    %v1136 = vunpack.c.l.b16 %v209
    %v1137 = vunpack.c.h.b16 %v209
    %v1138 = vunpack.c.l.b16 %v210
    %v1139 = vunpack.c.h.b16 %v210
    %v1140 = vunpack.c.l.b16 %v211
    %v1141 = vunpack.c.h.b16 %v211
    %v1142 = vunpack.c.l.b16 %v212
    %v1143 = vunpack.c.h.b16 %v212
    %v1144 = vunpack.c.l.b16 %v213
    %v1145 = vunpack.c.h.b16 %v213
    %v1146 = vunpack.c.l.b16 %v214
    %v1147 = vunpack.c.h.b16 %v214
    %v1148 = vunpack.c.l.b16 %v215
    %v1149 = vunpack.c.h.b16 %v215
    %v1150 = vunpack.c.l.b16 %v216
    %v1151 = vunpack.c.h.b16 %v216
    %v1152 = vunpack.c.l.b16 %v217
    %v1153 = vunpack.c.h.b16 %v217
    %v1154 = vunpack.c.l.b16 %v218
    %v1155 = vunpack.c.h.b16 %v218
    %v1156 = vunpack.c.l.b16 %v219
    %v1157 = vunpack.c.h.b16 %v219
    %v1158 = vunpack.c.l.b16 %v220
    %v1159 = vunpack.c.h.b16 %v220
    %v1160 = vunpack.c.l.b16 %v221
    %v1161 = vunpack.c.h.b16 %v221
    %v1162 = vunpack.c.l.b16 %v222
    %v1163 = vunpack.c.h.b16 %v222
    %v1164 = vunpack.c.l.b16 %v223
    %v1165 = vunpack.c.h.b16 %v223
    %v1166 = vunpack.c.l.b16 %v224
    %v1167 = vunpack.c.h.b16 %v224
    %v1168 = vunpack.c.l.b16 %v225
    %v1169 = vunpack.c.h.b16 %v225
    %v1170 = vunpack.c.l.b16 %v226
    %v1171 = vunpack.c.h.b16 %v226
    %v1172 = vunpack.c.l.b16 %v227
    %v1173 = vunpack.c.h.b16 %v227
    %v1174 = vunpack.c.l.b16 %v228
    %v1175 = vunpack.c.h.b16 %v228
    %v1176 = vunpack.c.l.b16 %v229
    %v1177 = vunpack.c.h.b16 %v229
    %v1178 = vunpack.c.l.b16 %v230
    %v1179 = vunpack.c.h.b16 %v230
    %v1180 = vunpack.c.l.b16 %v231
    %v1181 = vunpack.c.h.b16 %v231
    %v1182 = vunpack.c.l.b16 %v232
    %v1183 = vunpack.c.h.b16 %v232
    %v1184 = vunpack.c.l.b16 %v233
    %v1185 = vunpack.c.h.b16 %v233
    %v1186 = vunpack.c.l.b16 %v234
    %v1187 = vunpack.c.h.b16 %v234
    %v1188 = vunpack.c.l.b16 %v235
    %v1189 = vunpack.c.h.b16 %v235
    %v1190 = vunpack.c.l.b16 %v236
    %v1191 = vunpack.c.h.b16 %v236
    %v1192 = vunpack.c.l.b16 %v237
    %v1193 = vunpack.c.h.b16 %v237
    %v1194 = vunpack.c.l.b16 %v238
    %v1195 = vunpack.c.h.b16 %v238
    %v1196 = vunpack.c.l.b16 %v239
    %v1197 = vunpack.c.h.b16 %v239
    %v1198 = vunpack.c.l.b16 %v240
    %v1199 = vunpack.c.h.b16 %v240
    %v1200 = vunpack.c.l.b16 %v241
    %v1201 = vunpack.c.h.b16 %v241
    %v1202 = vunpack.c.l.b16 %v242
    %v1203 = vunpack.c.h.b16 %v242
    %v1204 = vunpack.c.l.b16 %v243
    %v1205 = vunpack.c.h.b16 %v243
    %v1206 = vunpack.c.l.b16 %v244
    %v1207 = vunpack.c.h.b16 %v244
    %v1208 = vunpack.c.l.b16 %v245
    %v1209 = vunpack.c.h.b16 %v245
    %v1210 = vunpack.c.l.b16 %v246
    %v1211 = vunpack.c.h.b16 %v246
    %v1212 = vunpack.c.l.b16 %v247
    %v1213 = vunpack.c.h.b16 %v247
    %v1214 = vunpack.c.l.b16 %v248
    %v1215 = vunpack.c.h.b16 %v248
    %v1216 = vunpack.c.l.b16 %v249
    %v1217 = vunpack.c.h.b16 %v249
    %v1218 = vunpack.c.l.b16 %v250
    %v1219 = vunpack.c.h.b16 %v250
    %v1220 = vunpack.c.l.b16 %v251
    %v1221 = vunpack.c.h.b16 %v251
    %v1222 = vunpack.c.l.b16 %v252
    %v1223 = vunpack.c.h.b16 %v252
    %v1224 = vunpack.c.l.b16 %v253
    %v1225 = vunpack.c.h.b16 %v253
    %v1226 = vunpack.c.l.b16 %v254
    %v1227 = vunpack.c.h.b16 %v254
    %v1228 = vunpack.c.l.b16 %v255
    %v1229 = vunpack.c.h.b16 %v255
    %v1230 = vunpack.c.l.b16 %v256
    %v1231 = vunpack.c.h.b16 %v256
    %v1232 = vunpack.c.l.b16 %v257
    %v1233 = vunpack.c.h.b16 %v257
    %v1234 = vunpack.c.l.b16 %v258
    %v1235 = vunpack.c.h.b16 %v258
    %v1236 = vunpack.c.l.b16 %v259
    %v1237 = vunpack.c.h.b16 %v259
    %v1238 = vunpack.c.l.b16 %v260
    %v1239 = vunpack.c.h.b16 %v260
    %v1240 = vunpack.c.l.b16 %v261
    %v1241 = vunpack.c.h.b16 %v261
    %v1242 = vunpack.c.l.b16 %v262
    %v1243 = vunpack.c.h.b16 %v262
    %v1244 = vunpack.c.l.b16 %v263
    %v1245 = vunpack.c.h.b16 %v263
    %v1246 = vunpack.c.l.b16 %v264
    %v1247 = vunpack.c.h.b16 %v264
    %v1248 = vunpack.c.l.b16 %v265
    %v1249 = vunpack.c.h.b16 %v265
    %v1250 = vunpack.c.l.b16 %v266
    %v1251 = vunpack.c.h.b16 %v266
    %v1252 = vunpack.c.l.b16 %v267
    %v1253 = vunpack.c.h.b16 %v267
    %v1254 = vunpack.c.l.b16 %v268
    %v1255 = vunpack.c.h.b16 %v268
    %v1256 = vunpack.c.l.b16 %v269
    %v1257 = vunpack.c.h.b16 %v269
    %v1258 = vunpack.c.l.b16 %v270
    %v1259 = vunpack.c.h.b16 %v270
    %v1260 = vunpack.c.l.b16 %v271
    %v1261 = vunpack.c.h.b16 %v271
    %v1262 = vunpack.c.l.b16 %v272
    %v1263 = vunpack.c.h.b16 %v272
    %v1264 = vunpack.c.l.b16 %v273
    %v1265 = vunpack.c.h.b16 %v273
    %v1266 = vunpack.c.l.b16 %v274
    %v1267 = vunpack.c.h.b16 %v274
    %v1268 = vunpack.c.l.b16 %v275
    %v1269 = vunpack.c.h.b16 %v275
    %v1270 = vunpack.c.l.b16 %v276
    %v1271 = vunpack.c.h.b16 %v276
    %v1272 = vunpack.c.l.b16 %v277
    %v1273 = vunpack.c.h.b16 %v277
    %v1274 = vunpack.c.l.b16 %v278
    %v1275 = vunpack.c.h.b16 %v278
    %v1276 = vunpack.c.l.b16 %v279
    %v1277 = vunpack.c.h.b16 %v279
    %v1278 = vunpack.c.l.b16 %v280
    %v1279 = vunpack.c.h.b16 %v280
    %v1280 = vunpack.c.l.b16 %v281
    %v1281 = vunpack.c.h.b16 %v281
    %v1282 = vunpack.c.l.b16 %v282
    %v1283 = vunpack.c.h.b16 %v282
    %v1284 = vunpack.c.l.b16 %v283
    %v1285 = vunpack.c.h.b16 %v283
    %v1286 = vunpack.c.l.b16 %v284
    %v1287 = vunpack.c.h.b16 %v284
    %v1288 = vunpack.c.l.b16 %v285
    %v1289 = vunpack.c.h.b16 %v285
    %v1290 = vunpack.c.l.b16 %v286
    %v1291 = vunpack.c.h.b16 %v286
    %v1292 = vunpack.c.l.b16 %v287
    %v1293 = vunpack.c.h.b16 %v287
    %v1294 = vunpack.c.l.b16 %v288
    %v1295 = vunpack.c.h.b16 %v288
    %v1296 = vunpack.c.l.b16 %v289
    %v1297 = vunpack.c.h.b16 %v289
    %v1298 = vunpack.c.l.b16 %v290
    %v1299 = vunpack.c.h.b16 %v290
    %v1300 = vunpack.c.l.b16 %v291
    %v1301 = vunpack.c.h.b16 %v291
    %v1302 = vunpack.c.l.b16 %v292
    %v1303 = vunpack.c.h.b16 %v292
    %v1304 = vunpack.c.l.b16 %v293
    %v1305 = vunpack.c.h.b16 %v293
    %v1306 = vunpack.c.l.b16 %v294
    %v1307 = vunpack.c.h.b16 %v294
    %v1308 = vunpack.c.l.b16 %v295
    %v1309 = vunpack.c.h.b16 %v295
    %v1310 = vunpack.c.l.b16 %v296
    %v1311 = vunpack.c.h.b16 %v296
    %v1312 = vunpack.c.l.b16 %v297
    %v1313 = vunpack.c.h.b16 %v297
    %v1314 = vunpack.c.l.b16 %v298
    %v1315 = vunpack.c.h.b16 %v298
    %v1316 = vunpack.c.l.b16 %v299
    %v1317 = vunpack.c.h.b16 %v299
    %v1318 = vunpack.c.l.b16 %v300
    %v1319 = vunpack.c.h.b16 %v300
    %v1320 = vunpack.c.l.b16 %v301
    %v1321 = vunpack.c.h.b16 %v301
    %v1322 = vunpack.c.l.b16 %v302
    %v1323 = vunpack.c.h.b16 %v302
    %v1324 = vunpack.c.l.b16 %v303
    %v1325 = vunpack.c.h.b16 %v303
    %v1326 = vunpack.c.l.b16 %v304
    %v1327 = vunpack.c.h.b16 %v304
    %v1328 = vunpack.c.l.b16 %v305
    %v1329 = vunpack.c.h.b16 %v305
    %v1330 = vunpack.c.l.b16 %v306
    %v1331 = vunpack.c.h.b16 %v306
    %v1332 = vunpack.c.l.b16 %v307
    %v1333 = vunpack.c.h.b16 %v307
    %v1334 = vunpack.c.l.b16 %v308
    %v1335 = vunpack.c.h.b16 %v308
    %v1336 = vunpack.c.l.b16 %v309
    %v1337 = vunpack.c.h.b16 %v309
    %v1338 = vunpack.c.l.b16 %v310
    %v1339 = vunpack.c.h.b16 %v310
    %v1340 = vunpack.c.l.b16 %v311
    %v1341 = vunpack.c.h.b16 %v311
    %v1342 = vunpack.c.l.b16 %v312
    %v1343 = vunpack.c.h.b16 %v312
    %v1344 = vunpack.c.l.b16 %v313
    %v1345 = vunpack.c.h.b16 %v313
    %v1346 = vunpack.c.l.b16 %v314
    %v1347 = vunpack.c.h.b16 %v314
    %v1348 = vunpack.c.l.b16 %v315
    %v1349 = vunpack.c.h.b16 %v315
    %v1350 = vunpack.c.l.b16 %v316
    %v1351 = vunpack.c.h.b16 %v316
    %v1352 = vunpack.c.l.b16 %v317
    %v1353 = vunpack.c.h.b16 %v317
    %v1354 = vunpack.c.l.b16 %v318
    %v1355 = vunpack.c.h.b16 %v318
    %v1356 = vunpack.c.l.b16 %v319
    %v1357 = vunpack.c.h.b16 %v319
    %v1358 = vunpack.c.l.b16 %v320
    %v1359 = vunpack.c.h.b16 %v320
    %v1360 = vunpack.c.l.b16 %v321
    %v1361 = vunpack.c.h.b16 %v321
    %v1362 = vunpack.c.l.b16 %v322
    %v1363 = vunpack.c.h.b16 %v322
    %v1364 = vunpack.c.l.b16 %v323
    %v1365 = vunpack.c.h.b16 %v323
    %v1366 = vunpack.c.l.b16 %v324
    %v1367 = vunpack.c.h.b16 %v324
    %v1368 = vunpack.c.l.b16 %v325
    %v1369 = vunpack.c.h.b16 %v325
    %v1370 = vunpack.c.l.b16 %v326
    %v1371 = vunpack.c.h.b16 %v326
    %v1372 = vunpack.c.l.b16 %v327
    %v1373 = vunpack.c.h.b16 %v327
    %v1374 = vunpack.c.l.b16 %v328
    %v1375 = vunpack.c.h.b16 %v328
    %v1376 = vunpack.c.l.b16 %v329
    %v1377 = vunpack.c.h.b16 %v329
    %v1378 = vunpack.c.l.b16 %v330
    %v1379 = vunpack.c.h.b16 %v330
    %v1380 = vunpack.c.l.b16 %v331
    %v1381 = vunpack.c.h.b16 %v331
    %v1382 = vunpack.c.l.b16 %v332
    %v1383 = vunpack.c.h.b16 %v332
    %v1384 = vunpack.c.l.b16 %v333
    %v1385 = vunpack.c.h.b16 %v333
    %v1386 = vunpack.c.l.b16 %v334
    %v1387 = vunpack.c.h.b16 %v334
    %v1388 = vunpack.c.l.b16 %v335
    %v1389 = vunpack.c.h.b16 %v335
    %v1390 = vunpack.c.l.b16 %v336
    %v1391 = vunpack.c.h.b16 %v336
    %v1392 = vunpack.c.l.b16 %v337
    %v1393 = vunpack.c.h.b16 %v337
    %v1394 = vunpack.c.l.b16 %v338
    %v1395 = vunpack.c.h.b16 %v338
    %v1396 = vunpack.c.l.b16 %v339
    %v1397 = vunpack.c.h.b16 %v339
    %v1398 = vunpack.c.l.b16 %v340
    %v1399 = vunpack.c.h.b16 %v340
    %v1400 = vunpack.c.l.b16 %v341
    %v1401 = vunpack.c.h.b16 %v341
    %v1402 = vunpack.c.l.b16 %v342
    %v1403 = vunpack.c.h.b16 %v342
    %v1404 = vunpack.c.l.b16 %v343
    %v1405 = vunpack.c.h.b16 %v343
    %v1406 = vunpack.c.l.b16 %v344
    %v1407 = vunpack.c.h.b16 %v344
    %v1408 = vunpack.c.l.b16 %v345
    %v1409 = vunpack.c.h.b16 %v345
    %v1410 = vunpack.c.l.b16 %v346
    %v1411 = vunpack.c.h.b16 %v346
    %v1412 = vunpack.c.l.b16 %v347
    %v1413 = vunpack.c.h.b16 %v347
    %v1414 = vunpack.c.l.b16 %v348
    %v1415 = vunpack.c.h.b16 %v348
    %v1416 = vunpack.c.l.b16 %v349
    %v1417 = vunpack.c.h.b16 %v349
    %v1418 = vunpack.c.l.b16 %v350
    %v1419 = vunpack.c.h.b16 %v350
    %v1420 = vunpack.c.l.b16 %v351
    %v1421 = vunpack.c.h.b16 %v351
    %v1422 = vunpack.c.l.b16 %v352
    %v1423 = vunpack.c.h.b16 %v352
    %v1424 = vunpack.c.l.b16 %v353
    %v1425 = vunpack.c.h.b16 %v353
    %v1426 = vunpack.c.l.b16 %v354
    %v1427 = vunpack.c.h.b16 %v354
    %v1428 = vunpack.c.l.b16 %v355
    %v1429 = vunpack.c.h.b16 %v355
    %v1430 = vunpack.c.l.b16 %v356
    %v1431 = vunpack.c.h.b16 %v356
    %v1432 = vunpack.c.l.b16 %v357
    %v1433 = vunpack.c.h.b16 %v357
    %v1434 = vunpack.c.l.b16 %v358
    %v1435 = vunpack.c.h.b16 %v358
    %v1436 = vunpack.c.l.b16 %v359
    %v1437 = vunpack.c.h.b16 %v359
    %v1438 = vunpack.c.l.b16 %v360
    %v1439 = vunpack.c.h.b16 %v360
    %v1440 = vunpack.c.l.b16 %v361
    %v1441 = vunpack.c.h.b16 %v361
    %v1442 = vunpack.c.l.b16 %v362
    %v1443 = vunpack.c.h.b16 %v362
    %v1444 = vunpack.c.l.b16 %v363
    %v1445 = vunpack.c.h.b16 %v363
    %v1446 = vunpack.c.l.b16 %v364
    %v1447 = vunpack.c.h.b16 %v364
    %v1448 = vunpack.c.l.b16 %v365
    %v1449 = vunpack.c.h.b16 %v365
    %v1450 = vunpack.c.l.b16 %v366
    %v1451 = vunpack.c.h.b16 %v366
    %v1452 = vunpack.c.l.b16 %v367
    %v1453 = vunpack.c.h.b16 %v367
    %v1454 = vunpack.c.l.b16 %v368
    %v1455 = vunpack.c.h.b16 %v368
    %v1456 = vunpack.c.l.b16 %v369
    %v1457 = vunpack.c.h.b16 %v369
    %v1458 = vunpack.c.l.b16 %v370
    %v1459 = vunpack.c.h.b16 %v370
    %v1460 = vunpack.c.l.b16 %v371
    %v1461 = vunpack.c.h.b16 %v371
    %v1462 = vunpack.c.l.b16 %v372
    %v1463 = vunpack.c.h.b16 %v372
    %v1464 = vunpack.c.l.b16 %v373
    %v1465 = vunpack.c.h.b16 %v373
    %v1466 = vunpack.c.l.b16 %v374
    %v1467 = vunpack.c.h.b16 %v374
    %v1468 = vunpack.c.l.b16 %v375
    %v1469 = vunpack.c.h.b16 %v375
    %v1470 = vunpack.c.l.b16 %v376
    %v1471 = vunpack.c.h.b16 %v376
    %v1472 = vunpack.c.l.b16 %v377
    %v1473 = vunpack.c.h.b16 %v377
    %v1474 = vunpack.c.l.b16 %v378
    %v1475 = vunpack.c.h.b16 %v378
    %v1476 = vunpack.c.l.b16 %v379
    %v1477 = vunpack.c.h.b16 %v379
    %v1478 = vunpack.c.l.b16 %v380
    %v1479 = vunpack.c.h.b16 %v380
    %v1480 = vunpack.c.l.b16 %v381
    %v1481 = vunpack.c.h.b16 %v381
    %v1482 = vunpack.c.l.b16 %v382
    %v1483 = vunpack.c.h.b16 %v382
    %v1484 = vunpack.c.l.b16 %v383
    %v1485 = vunpack.c.h.b16 %v383
    %v1486 = vunpack.c.l.b16 %v384
    %v1487 = vunpack.c.h.b16 %v384
    %v1488 = vunpack.c.l.b16 %v385
    %v1489 = vunpack.c.h.b16 %v385
    %v1490 = vunpack.c.l.b16 %v386
    %v1491 = vunpack.c.h.b16 %v386
    %v1492 = vunpack.c.l.b16 %v387
    %v1493 = vunpack.c.h.b16 %v387
    %v1494 = vunpack.c.l.b16 %v388
    %v1495 = vunpack.c.h.b16 %v388
    %v1496 = vunpack.c.l.b16 %v389
    %v1497 = vunpack.c.h.b16 %v389
    %v1498 = vunpack.c.l.b16 %v390
    %v1499 = vunpack.c.h.b16 %v390
    %v1500 = vunpack.c.l.b16 %v391
    %v1501 = vunpack.c.h.b16 %v391
    %v1502 = vunpack.c.l.b16 %v392
    %v1503 = vunpack.c.h.b16 %v392
    %v1504 = vunpack.c.l.b16 %v393
    %v1505 = vunpack.c.h.b16 %v393
    %v1506 = vunpack.c.l.b16 %v394
    %v1507 = vunpack.c.h.b16 %v394
    %v1508 = vunpack.c.l.b16 %v395
    %v1509 = vunpack.c.h.b16 %v395
    %v1510 = vunpack.c.l.b16 %v396
    %v1511 = vunpack.c.h.b16 %v396
    %v1512 = vunpack.c.l.b16 %v397
    %v1513 = vunpack.c.h.b16 %v397
    %v1514 = vunpack.c.l.b16 %v398
    %v1515 = vunpack.c.h.b16 %v398
    %v1516 = vunpack.c.l.b16 %v399
    %v1517 = vunpack.c.h.b16 %v399
    %v1518 = vunpack.c.l.b16 %v400
    %v1519 = vunpack.c.h.b16 %v400
    %v1520 = vunpack.c.l.b16 %v401
    %v1521 = vunpack.c.h.b16 %v401
    %v1522 = vunpack.c.l.b16 %v402
    %v1523 = vunpack.c.h.b16 %v402
    %v1524 = vunpack.c.l.b16 %v403
    %v1525 = vunpack.c.h.b16 %v403
    %v1526 = vunpack.c.l.b16 %v404
    %v1527 = vunpack.c.h.b16 %v404
    %v1528 = vunpack.c.l.b16 %v405
    %v1529 = vunpack.c.h.b16 %v405
    %v1530 = vunpack.c.l.b16 %v406
    %v1531 = vunpack.c.h.b16 %v406
    %v1532 = vunpack.c.l.b16 %v407
    %v1533 = vunpack.c.h.b16 %v407
    %v1534 = vunpack.c.l.b16 %v408
    %v1535 = vunpack.c.h.b16 %v408
    %v1536 = vunpack.c.l.b16 %v409
    %v1537 = vunpack.c.h.b16 %v409
    %v1538 = vunpack.c.l.b16 %v410
    %v1539 = vunpack.c.h.b16 %v410
    %v1540 = vunpack.c.l.b16 %v411
    %v1541 = vunpack.c.h.b16 %v411
    %v1542 = vunpack.c.l.b16 %v412
    %v1543 = vunpack.c.h.b16 %v412
    %v1544 = vunpack.c.l.b16 %v413
    %v1545 = vunpack.c.h.b16 %v413
    %v1546 = vunpack.c.l.b16 %v414
    %v1547 = vunpack.c.h.b16 %v414
    %v1548 = vunpack.c.l.b16 %v415
    %v1549 = vunpack.c.h.b16 %v415
    %v1550 = vunpack.c.l.b16 %v416
    %v1551 = vunpack.c.h.b16 %v416
    %v1552 = vunpack.c.l.b16 %v417
    %v1553 = vunpack.c.h.b16 %v417
    %v1554 = vunpack.c.l.b16 %v418
    %v1555 = vunpack.c.h.b16 %v418
    %v1556 = vunpack.c.l.b16 %v419
    %v1557 = vunpack.c.h.b16 %v419
    %v1558 = vunpack.c.l.b16 %v420
    %v1559 = vunpack.c.h.b16 %v420
    %v1560 = vunpack.c.l.b16 %v421
    %v1561 = vunpack.c.h.b16 %v421
    %v1562 = vunpack.c.l.b16 %v422
    %v1563 = vunpack.c.h.b16 %v422
    %v1564 = vunpack.c.l.b16 %v423
    %v1565 = vunpack.c.h.b16 %v423
    %v1566 = vunpack.c.l.b16 %v424
    %v1567 = vunpack.c.h.b16 %v424
    %v1568 = vunpack.c.l.b16 %v425
    %v1569 = vunpack.c.h.b16 %v425
    %v1570 = vunpack.c.l.b16 %v426
    %v1571 = vunpack.c.h.b16 %v426
    %v1572 = vunpack.c.l.b16 %v427
    %v1573 = vunpack.c.h.b16 %v427
    %v1574 = vunpack.c.l.b16 %v428
    %v1575 = vunpack.c.h.b16 %v428
    %v1576 = vunpack.c.l.b16 %v429
    %v1577 = vunpack.c.h.b16 %v429
    %v1578 = vunpack.c.l.b16 %v430
    %v1579 = vunpack.c.h.b16 %v430
    %v1580 = vunpack.c.l.b16 %v431
    %v1581 = vunpack.c.h.b16 %v431
    %v1582 = vunpack.c.l.b16 %v432
    %v1583 = vunpack.c.h.b16 %v432
    %v1584 = vunpack.c.l.b16 %v433
    %v1585 = vunpack.c.h.b16 %v433
    %v1586 = vunpack.c.l.b16 %v434
    %v1587 = vunpack.c.h.b16 %v434
    %v1588 = vunpack.c.l.b16 %v435
    %v1589 = vunpack.c.h.b16 %v435
    %v1590 = vunpack.c.l.b16 %v436
    %v1591 = vunpack.c.h.b16 %v436
    %v1592 = vunpack.c.l.b16 %v437
    %v1593 = vunpack.c.h.b16 %v437
    %v1594 = vunpack.c.l.b16 %v438
    %v1595 = vunpack.c.h.b16 %v438
    %v1596 = vunpack.c.l.b16 %v439
    %v1597 = vunpack.c.h.b16 %v439
    %v1598 = vunpack.c.l.b16 %v440
    %v1599 = vunpack.c.h.b16 %v440
    %v1600 = vunpack.c.l.b16 %v441
    %v1601 = vunpack.c.h.b16 %v441
    %v1602 = vunpack.c.l.b16 %v442
    %v1603 = vunpack.c.h.b16 %v442
    %v1604 = vunpack.c.l.b16 %v443
    %v1605 = vunpack.c.h.b16 %v443
    %v1606 = vunpack.c.l.b16 %v444
    %v1607 = vunpack.c.h.b16 %v444
    %v1608 = vunpack.c.l.b16 %v445
    %v1609 = vunpack.c.h.b16 %v445
    %v1610 = vunpack.c.l.b16 %v446
    %v1611 = vunpack.c.h.b16 %v446
    %v1612 = vunpack.c.l.b16 %v447
    %v1613 = vunpack.c.h.b16 %v447
    %v1614 = vunpack.c.l.b16 %v448
    %v1615 = vunpack.c.h.b16 %v448
    %v1616 = vunpack.c.l.b16 %v449
    %v1617 = vunpack.c.h.b16 %v449
    %v1618 = vunpack.c.l.b16 %v450
    %v1619 = vunpack.c.h.b16 %v450
    %v1620 = vunpack.c.l.b16 %v451
    %v1621 = vunpack.c.h.b16 %v451
    %v1622 = vunpack.c.l.b16 %v452
    %v1623 = vunpack.c.h.b16 %v452
    %v1624 = vunpack.c.l.b16 %v453
    %v1625 = vunpack.c.h.b16 %v453
    %v1626 = vunpack.c.l.b16 %v454
    %v1627 = vunpack.c.h.b16 %v454
    %v1628 = vunpack.c.l.b16 %v455
    %v1629 = vunpack.c.h.b16 %v455
    %v1630 = vunpack.c.l.b16 %v456
    %v1631 = vunpack.c.h.b16 %v456
    %v1632 = vunpack.c.l.b16 %v457
    %v1633 = vunpack.c.h.b16 %v457
    %v1634 = vunpack.c.l.b16 %v458
    %v1635 = vunpack.c.h.b16 %v458
    %v1636 = vunpack.c.l.b16 %v459
    %v1637 = vunpack.c.h.b16 %v459
    %v1638 = vunpack.c.l.b16 %v460
    %v1639 = vunpack.c.h.b16 %v460
    %v1640 = vunpack.c.l.b16 %v461
    %v1641 = vunpack.c.h.b16 %v461
    %v1642 = vunpack.c.l.b16 %v462
    %v1643 = vunpack.c.h.b16 %v462
    %v1644 = vunpack.c.l.b16 %v463
    %v1645 = vunpack.c.h.b16 %v463
    %v1646 = vunpack.c.l.b16 %v464
    %v1647 = vunpack.c.h.b16 %v464
    %v1648 = vunpack.c.l.b16 %v465
    %v1649 = vunpack.c.h.b16 %v465
    %v1650 = vunpack.c.l.b16 %v466
    %v1651 = vunpack.c.h.b16 %v466
    %v1652 = vunpack.c.l.b16 %v467
    %v1653 = vunpack.c.h.b16 %v467
    %v1654 = vunpack.c.l.b16 %v468
    %v1655 = vunpack.c.h.b16 %v468
    %v1656 = vunpack.c.l.b16 %v469
    %v1657 = vunpack.c.h.b16 %v469
    %v1658 = vunpack.c.l.b16 %v470
    %v1659 = vunpack.c.h.b16 %v470
    %v1660 = vunpack.c.l.b16 %v471
    %v1661 = vunpack.c.h.b16 %v471
    %v1662 = vunpack.c.l.b16 %v472
    %v1663 = vunpack.c.h.b16 %v472
    %v1664 = vunpack.c.l.b16 %v473
    %v1665 = vunpack.c.h.b16 %v473
    %v1666 = vunpack.c.l.b16 %v474
    %v1667 = vunpack.c.h.b16 %v474
    %v1668 = vunpack.c.l.b16 %v475
    %v1669 = vunpack.c.h.b16 %v475
    %v1670 = vunpack.c.l.b16 %v476
    %v1671 = vunpack.c.h.b16 %v476
    %v1672 = vunpack.c.l.b16 %v477
    %v1673 = vunpack.c.h.b16 %v477
    %v1674 = vunpack.c.l.b16 %v478
    %v1675 = vunpack.c.h.b16 %v478
    %v1676 = vunpack.c.l.b16 %v479
    %v1677 = vunpack.c.h.b16 %v479
    %v1678 = vunpack.c.l.b16 %v480
    %v1679 = vunpack.c.h.b16 %v480
    %v1680 = vunpack.c.l.b16 %v481
    %v1681 = vunpack.c.h.b16 %v481
    %v1682 = vunpack.c.l.b16 %v482
    %v1683 = vunpack.c.h.b16 %v482
    %v1684 = vunpack.c.l.b16 %v483
    %v1685 = vunpack.c.h.b16 %v483
    %v1686 = vunpack.c.l.b16 %v484
    %v1687 = vunpack.c.h.b16 %v484
    %v1688 = vunpack.c.l.b16 %v485
    %v1689 = vunpack.c.h.b16 %v485
    %v1690 = vunpack.c.l.b16 %v486
    %v1691 = vunpack.c.h.b16 %v486
    %v1692 = vunpack.c.l.b16 %v487
    %v1693 = vunpack.c.h.b16 %v487
    %v1694 = vunpack.c.l.b16 %v488
    %v1695 = vunpack.c.h.b16 %v488
    %v1696 = vunpack.c.l.b16 %v489
    %v1697 = vunpack.c.h.b16 %v489
    %v1698 = vunpack.c.l.b16 %v490
    %v1699 = vunpack.c.h.b16 %v490
    %v1700 = vunpack.c.l.b16 %v491
    %v1701 = vunpack.c.h.b16 %v491
    %v1702 = vunpack.c.l.b16 %v492
    %v1703 = vunpack.c.h.b16 %v492
    %v1704 = vunpack.c.l.b16 %v493
    %v1705 = vunpack.c.h.b16 %v493
    %v1706 = vunpack.c.l.b16 %v494
    %v1707 = vunpack.c.h.b16 %v494
    %v1708 = vunpack.c.l.b16 %v495
    %v1709 = vunpack.c.h.b16 %v495
    %v1710 = vunpack.c.l.b16 %v496
    %v1711 = vunpack.c.h.b16 %v496
    %v1712 = vunpack.c.l.b16 %v497
    %v1713 = vunpack.c.h.b16 %v497
    %v1714 = vunpack.c.l.b16 %v498
    %v1715 = vunpack.c.h.b16 %v498
    %v1716 = vunpack.c.l.b16 %v499
    %v1717 = vunpack.c.h.b16 %v499
    %v1718 = vunpack.c.l.b16 %v500
    %v1719 = vunpack.c.h.b16 %v500
    %v1720 = vunpack.c.l.b16 %v501
    %v1721 = vunpack.c.h.b16 %v501
    %v1722 = vunpack.c.l.b16 %v502
    %v1723 = vunpack.c.h.b16 %v502
    %v1724 = vunpack.c.l.b16 %v503
    %v1725 = vunpack.c.h.b16 %v503
    %v1726 = vunpack.c.l.b16 %v504
    %v1727 = vunpack.c.h.b16 %v504
    %v1728 = vunpack.c.l.b16 %v505
    %v1729 = vunpack.c.h.b16 %v505
    %v1730 = vunpack.c.l.b16 %v506
    %v1731 = vunpack.c.h.b16 %v506
    %v1732 = vunpack.c.l.b16 %v507
    %v1733 = vunpack.c.h.b16 %v507
    %v1734 = vunpack.c.l.b16 %v508
    %v1735 = vunpack.c.h.b16 %v508
    %v1736 = vunpack.c.l.b16 %v509
    %v1737 = vunpack.c.h.b16 %v509
    %v1738 = vunpack.c.l.b16 %v510
    %v1739 = vunpack.c.h.b16 %v510
    %v1740 = vunpack.c.l.b16 %v511
    %v1741 = vunpack.c.h.b16 %v511
    %v1742 = vunpack.c.l.b16 %v512
    %v1743 = vunpack.c.h.b16 %v512
    %v1744 = vunpack.c.l.b16 %v513
    %v1745 = vunpack.c.h.b16 %v513
    %v1746 = vunpack.c.l.b16 %v514
    %v1747 = vunpack.c.h.b16 %v514
    %v1748 = vunpack.c.l.b16 %v515
    %v1749 = vunpack.c.h.b16 %v515
    %v1750 = vunpack.c.l.b16 %v516
    %v1751 = vunpack.c.h.b16 %v516
    %v1752 = vunpack.c.l.b16 %v517
    %v1753 = vunpack.c.h.b16 %v517
    %v1754 = vunpack.c.l.b16 %v518
    %v1755 = vunpack.c.h.b16 %v518
    %v1756 = vunpack.c.l.b16 %v519
    %v1757 = vunpack.c.h.b16 %v519
    %v1758 = vunpack.c.l.b16 %v520
    %v1759 = vunpack.c.h.b16 %v520
    %v1760 = vunpack.c.l.b16 %v521
    %v1761 = vunpack.c.h.b16 %v521
    %v1762 = vunpack.c.l.b16 %v522
    %v1763 = vunpack.c.h.b16 %v522
    %v1764 = vunpack.c.l.b16 %v523
    %v1765 = vunpack.c.h.b16 %v523
    %v1766 = vpack.c.b16 %v1000, %v998
    %v1767 = vpack.c.b16 %v1001, %v999
    %v1768 = vpack.c.b16 %v1004, %v1002
    %v1769 = vpack.c.b16 %v1005, %v1003
    %v1770 = vpack.c.b16 %v1008, %v1006
    %v1771 = vpack.c.b16 %v1009, %v1007
    %v1772 = vpack.c.b16 %v1012, %v1010
    %v1773 = vpack.c.b16 %v1013, %v1011
    %v1774 = vpack.c.b16 %v1016, %v1014
    %v1775 = vpack.c.b16 %v1017, %v1015
    %v1776 = vpack.c.b16 %v1020, %v1018
    %v1777 = vpack.c.b16 %v1021, %v1019
    %v1778 = vpack.c.b16 %v1024, %v1022
    %v1779 = vpack.c.b16 %v1025, %v1023
    %v1780 = vpack.c.b16 %v1028, %v1026
    %v1781 = vpack.c.b16 %v1029, %v1027
    %v1782 = vpack.c.b16 %v1032, %v1030
    %v1783 = vpack.c.b16 %v1033, %v1031
    %v1784 = vpack.c.b16 %v1036, %v1034
    %v1785 = vpack.c.b16 %v1037, %v1035
    %v1786 = vpack.c.b16 %v1040, %v1038
    %v1787 = vpack.c.b16 %v1041, %v1039
    %v1788 = vpack.c.b16 %v1044, %v1042
    %v1789 = vpack.c.b16 %v1045, %v1043
    %v1790 = vpack.c.b16 %v1048, %v1046
    %v1791 = vpack.c.b16 %v1049, %v1047
    %v1792 = vpack.c.b16 %v1052, %v1050
    %v1793 = vpack.c.b16 %v1053, %v1051
    %v1794 = vpack.c.b16 %v1056, %v1054
    %v1795 = vpack.c.b16 %v1057, %v1055
    %v1796 = vpack.c.b16 %v1060, %v1058
    %v1797 = vpack.c.b16 %v1061, %v1059
    %v1798 = vpack.c.b16 %v1064, %v1062
    %v1799 = vpack.c.b16 %v1065, %v1063
    %v1800 = vpack.c.b16 %v1068, %v1066
    %v1801 = vpack.c.b16 %v1069, %v1067
    %v1802 = vpack.c.b16 %v1072, %v1070
    %v1803 = vpack.c.b16 %v1073, %v1071
    %v1804 = vpack.c.b16 %v1076, %v1074
    %v1805 = vpack.c.b16 %v1077, %v1075
    %v1806 = vpack.c.b16 %v1080, %v1078
    %v1807 = vpack.c.b16 %v1081, %v1079
    %v1808 = vpack.c.b16 %v1084, %v1082
    %v1809 = vpack.c.b16 %v1085, %v1083
    %v1810 = vpack.c.b16 %v1088, %v1086
    %v1811 = vpack.c.b16 %v1089, %v1087
    %v1812 = vpack.c.b16 %v1092, %v1090
    %v1813 = vpack.c.b16 %v1093, %v1091
    %v1814 = vpack.c.b16 %v1096, %v1094
    %v1815 = vpack.c.b16 %v1097, %v1095
    %v1816 = vpack.c.b16 %v1100, %v1098
    %v1817 = vpack.c.b16 %v1101, %v1099
    %v1818 = vpack.c.b16 %v1104, %v1102
    %v1819 = vpack.c.b16 %v1105, %v1103
    %v1820 = vpack.c.b16 %v1108, %v1106
    %v1821 = vpack.c.b16 %v1109, %v1107
    %v1822 = vpack.c.b16 %v1112, %v1110
    %v1823 = vpack.c.b16 %v1113, %v1111
    %v1824 = vpack.c.b16 %v1116, %v1114
    %v1825 = vpack.c.b16 %v1117, %v1115
    %v1826 = vpack.c.b16 %v1120, %v1118
    %v1827 = vpack.c.b16 %v1121, %v1119
    %v1828 = vpack.c.b16 %v1124, %v1122
    %v1829 = vpack.c.b16 %v1125, %v1123
    %v1830 = vpack.c.b16 %v1128, %v1126
    %v1831 = vpack.c.b16 %v1129, %v1127
    %v1832 = vpack.c.b16 %v1132, %v1130
    %v1833 = vpack.c.b16 %v1133, %v1131
    %v1834 = vpack.c.b16 %v1136, %v1134
    %v1835 = vpack.c.b16 %v1137, %v1135
    %v1836 = vpack.c.b16 %v1140, %v1138
    %v1837 = vpack.c.b16 %v1141, %v1139
    %v1838 = vpack.c.b16 %v1144, %v1142
    %v1839 = vpack.c.b16 %v1145, %v1143
    %v1840 = vpack.c.b16 %v1148, %v1146
    %v1841 = vpack.c.b16 %v1149, %v1147
    %v1842 = vpack.c.b16 %v1152, %v1150
    %v1843 = vpack.c.b16 %v1153, %v1151
    %v1844 = vpack.c.b16 %v1156, %v1154
    %v1845 = vpack.c.b16 %v1157, %v1155
    %v1846 = vpack.c.b16 %v1160, %v1158
    %v1847 = vpack.c.b16 %v1161, %v1159
    %v1848 = vpack.c.b16 %v1164, %v1162
    %v1849 = vpack.c.b16 %v1165, %v1163
    %v1850 = vpack.c.b16 %v1168, %v1166
    %v1851 = vpack.c.b16 %v1169, %v1167
    %v1852 = vpack.c.b16 %v1172, %v1170
    %v1853 = vpack.c.b16 %v1173, %v1171
    %v1854 = vpack.c.b16 %v1176, %v1174
    %v1855 = vpack.c.b16 %v1177, %v1175
    %v1856 = vpack.c.b16 %v1180, %v1178
    %v1857 = vpack.c.b16 %v1181, %v1179
    %v1858 = vpack.c.b16 %v1184, %v1182
    %v1859 = vpack.c.b16 %v1185, %v1183
    %v1860 = vpack.c.b16 %v1188, %v1186
    %v1861 = vpack.c.b16 %v1189, %v1187
    %v1862 = vpack.c.b16 %v1192, %v1190
    %v1863 = vpack.c.b16 %v1193, %v1191
    %v1864 = vpack.c.b16 %v1196, %v1194
    %v1865 = vpack.c.b16 %v1197, %v1195
    %v1866 = vpack.c.b16 %v1200, %v1198
    %v1867 = vpack.c.b16 %v1201, %v1199
    %v1868 = vpack.c.b16 %v1204, %v1202
    %v1869 = vpack.c.b16 %v1205, %v1203
    %v1870 = vpack.c.b16 %v1208, %v1206
    %v1871 = vpack.c.b16 %v1209, %v1207
    %v1872 = vpack.c.b16 %v1212, %v1210
    %v1873 = vpack.c.b16 %v1213, %v1211
    %v1874 = vpack.c.b16 %v1216, %v1214
    %v1875 = vpack.c.b16 %v1217, %v1215
    %v1876 = vpack.c.b16 %v1220, %v1218
    %v1877 = vpack.c.b16 %v1221, %v1219
    %v1878 = vpack.c.b16 %v1224, %v1222
    %v1879 = vpack.c.b16 %v1225, %v1223
    %v1880 = vpack.c.b16 %v1228, %v1226
    %v1881 = vpack.c.b16 %v1229, %v1227
    %v1882 = vpack.c.b16 %v1232, %v1230
    %v1883 = vpack.c.b16 %v1233, %v1231
    %v1884 = vpack.c.b16 %v1236, %v1234
    %v1885 = vpack.c.b16 %v1237, %v1235
    %v1886 = vpack.c.b16 %v1240, %v1238
    %v1887 = vpack.c.b16 %v1241, %v1239
    %v1888 = vpack.c.b16 %v1244, %v1242
    %v1889 = vpack.c.b16 %v1245, %v1243
    %v1890 = vpack.c.b16 %v1248, %v1246
    %v1891 = vpack.c.b16 %v1249, %v1247
    %v1892 = vpack.c.b16 %v1252, %v1250
    %v1893 = vpack.c.b16 %v1253, %v1251
    %v1894 = vpack.c.b16 %v1256, %v1254
    %v1895 = vpack.c.b16 %v1257, %v1255
    %v1896 = vpack.c.b16 %v1260, %v1258
    %v1897 = vpack.c.b16 %v1261, %v1259
    %v1898 = vpack.c.b16 %v1264, %v1262
    %v1899 = vpack.c.b16 %v1265, %v1263
    %v1900 = vpack.c.b16 %v1268, %v1266
    %v1901 = vpack.c.b16 %v1269, %v1267
    %v1902 = vpack.c.b16 %v1272, %v1270
    %v1903 = vpack.c.b16 %v1273, %v1271
    %v1904 = vpack.c.b16 %v1276, %v1274
    %v1905 = vpack.c.b16 %v1277, %v1275
    %v1906 = vpack.c.b16 %v1280, %v1278
    %v1907 = vpack.c.b16 %v1281, %v1279
    %v1908 = vpack.c.b16 %v1284, %v1282
    %v1909 = vpack.c.b16 %v1285, %v1283
    %v1910 = vpack.c.b16 %v1288, %v1286
    %v1911 = vpack.c.b16 %v1289, %v1287
    %v1912 = vpack.c.b16 %v1292, %v1290
    %v1913 = vpack.c.b16 %v1293, %v1291
    %v1914 = vpack.c.b16 %v1296, %v1294
    %v1915 = vpack.c.b16 %v1297, %v1295
    %v1916 = vpack.c.b16 %v1300, %v1298
    %v1917 = vpack.c.b16 %v1301, %v1299
    %v1918 = vpack.c.b16 %v1304, %v1302
    %v1919 = vpack.c.b16 %v1305, %v1303
    %v1920 = vpack.c.b16 %v1308, %v1306
    %v1921 = vpack.c.b16 %v1309, %v1307
    %v1922 = vpack.c.b16 %v1312, %v1310
    %v1923 = vpack.c.b16 %v1313, %v1311
    %v1924 = vpack.c.b16 %v1316, %v1314
    %v1925 = vpack.c.b16 %v1317, %v1315
    %v1926 = vpack.c.b16 %v1320, %v1318
    %v1927 = vpack.c.b16 %v1321, %v1319
    %v1928 = vpack.c.b16 %v1324, %v1322
    %v1929 = vpack.c.b16 %v1325, %v1323
    %v1930 = vpack.c.b16 %v1328, %v1326
    %v1931 = vpack.c.b16 %v1329, %v1327
    %v1932 = vpack.c.b16 %v1332, %v1330
    %v1933 = vpack.c.b16 %v1333, %v1331
    %v1934 = vpack.c.b16 %v1336, %v1334
    %v1935 = vpack.c.b16 %v1337, %v1335
    %v1936 = vpack.c.b16 %v1340, %v1338
    %v1937 = vpack.c.b16 %v1341, %v1339
    %v1938 = vpack.c.b16 %v1344, %v1342
    %v1939 = vpack.c.b16 %v1345, %v1343
    %v1940 = vpack.c.b16 %v1348, %v1346
    %v1941 = vpack.c.b16 %v1349, %v1347
    %v1942 = vpack.c.b16 %v1352, %v1350
    %v1943 = vpack.c.b16 %v1353, %v1351
    %v1944 = vpack.c.b16 %v1356, %v1354
    %v1945 = vpack.c.b16 %v1357, %v1355
    %v1946 = vpack.c.b16 %v1360, %v1358
    %v1947 = vpack.c.b16 %v1361, %v1359
    %v1948 = vpack.c.b16 %v1364, %v1362
    %v1949 = vpack.c.b16 %v1365, %v1363
    %v1950 = vpack.c.b16 %v1368, %v1366
    %v1951 = vpack.c.b16 %v1369, %v1367
    %v1952 = vpack.c.b16 %v1372, %v1370
    %v1953 = vpack.c.b16 %v1373, %v1371
    %v1954 = vpack.c.b16 %v1376, %v1374
    %v1955 = vpack.c.b16 %v1377, %v1375
    %v1956 = vpack.c.b16 %v1380, %v1378
    %v1957 = vpack.c.b16 %v1381, %v1379
    %v1958 = vpack.c.b16 %v1384, %v1382
    %v1959 = vpack.c.b16 %v1385, %v1383
    %v1960 = vpack.c.b16 %v1388, %v1386
    %v1961 = vpack.c.b16 %v1389, %v1387
    %v1962 = vpack.c.b16 %v1392, %v1390
    %v1963 = vpack.c.b16 %v1393, %v1391
    %v1964 = vpack.c.b16 %v1396, %v1394
    %v1965 = vpack.c.b16 %v1397, %v1395
    %v1966 = vpack.c.b16 %v1400, %v1398
    %v1967 = vpack.c.b16 %v1401, %v1399
    %v1968 = vpack.c.b16 %v1404, %v1402
    %v1969 = vpack.c.b16 %v1405, %v1403
    %v1970 = vpack.c.b16 %v1408, %v1406
    %v1971 = vpack.c.b16 %v1409, %v1407
    %v1972 = vpack.c.b16 %v1412, %v1410
    %v1973 = vpack.c.b16 %v1413, %v1411
    %v1974 = vpack.c.b16 %v1416, %v1414
    %v1975 = vpack.c.b16 %v1417, %v1415
    %v1976 = vpack.c.b16 %v1420, %v1418
    %v1977 = vpack.c.b16 %v1421, %v1419
    %v1978 = vpack.c.b16 %v1424, %v1422
    %v1979 = vpack.c.b16 %v1425, %v1423
    %v1980 = vpack.c.b16 %v1428, %v1426
    %v1981 = vpack.c.b16 %v1429, %v1427
    %v1982 = vpack.c.b16 %v1432, %v1430
    %v1983 = vpack.c.b16 %v1433, %v1431
    %v1984 = vpack.c.b16 %v1436, %v1434
    %v1985 = vpack.c.b16 %v1437, %v1435
    %v1986 = vpack.c.b16 %v1440, %v1438
    %v1987 = vpack.c.b16 %v1441, %v1439
    %v1988 = vpack.c.b16 %v1444, %v1442
    %v1989 = vpack.c.b16 %v1445, %v1443
    %v1990 = vpack.c.b16 %v1448, %v1446
    %v1991 = vpack.c.b16 %v1449, %v1447
    %v1992 = vpack.c.b16 %v1452, %v1450
    %v1993 = vpack.c.b16 %v1453, %v1451
    %v1994 = vpack.c.b16 %v1456, %v1454
    %v1995 = vpack.c.b16 %v1457, %v1455
    %v1996 = vpack.c.b16 %v1460, %v1458
    %v1997 = vpack.c.b16 %v1461, %v1459
    %v1998 = vpack.c.b16 %v1464, %v1462
    %v1999 = vpack.c.b16 %v1465, %v1463
    %v2000 = vpack.c.b16 %v1468, %v1466
    %v2001 = vpack.c.b16 %v1469, %v1467
    %v2002 = vpack.c.b16 %v1472, %v1470
    %v2003 = vpack.c.b16 %v1473, %v1471
    %v2004 = vpack.c.b16 %v1476, %v1474
    %v2005 = vpack.c.b16 %v1477, %v1475
    %v2006 = vpack.c.b16 %v1480, %v1478
    %v2007 = vpack.c.b16 %v1481, %v1479
    %v2008 = vpack.c.b16 %v1484, %v1482
    %v2009 = vpack.c.b16 %v1485, %v1483
    %v2010 = vpack.c.b16 %v1488, %v1486
    %v2011 = vpack.c.b16 %v1489, %v1487
    %v2012 = vpack.c.b16 %v1492, %v1490
    %v2013 = vpack.c.b16 %v1493, %v1491
    %v2014 = vpack.c.b16 %v1496, %v1494
    %v2015 = vpack.c.b16 %v1497, %v1495
    %v2016 = vpack.c.b16 %v1500, %v1498
    %v2017 = vpack.c.b16 %v1501, %v1499
    %v2018 = vpack.c.b16 %v1504, %v1502
    %v2019 = vpack.c.b16 %v1505, %v1503
    %v2020 = vpack.c.b16 %v1508, %v1506
    %v2021 = vpack.c.b16 %v1509, %v1507
    %v2022 = vpack.c.b16 %v1512, %v1510
    %v2023 = vpack.c.b16 %v1513, %v1511
    %v2024 = vpack.c.b16 %v1516, %v1514
    %v2025 = vpack.c.b16 %v1517, %v1515
    %v2026 = vpack.c.b16 %v1520, %v1518
    %v2027 = vpack.c.b16 %v1521, %v1519
    %v2028 = vpack.c.b16 %v1524, %v1522
    %v2029 = vpack.c.b16 %v1525, %v1523
    %v2030 = vpack.c.b16 %v1528, %v1526
    %v2031 = vpack.c.b16 %v1529, %v1527
    %v2032 = vpack.c.b16 %v1532, %v1530
    %v2033 = vpack.c.b16 %v1533, %v1531
    %v2034 = vpack.c.b16 %v1536, %v1534
    %v2035 = vpack.c.b16 %v1537, %v1535
    %v2036 = vpack.c.b16 %v1540, %v1538
    %v2037 = vpack.c.b16 %v1541, %v1539
    %v2038 = vpack.c.b16 %v1544, %v1542
    %v2039 = vpack.c.b16 %v1545, %v1543
    %v2040 = vpack.c.b16 %v1548, %v1546
    %v2041 = vpack.c.b16 %v1549, %v1547
    %v2042 = vpack.c.b16 %v1552, %v1550
    %v2043 = vpack.c.b16 %v1553, %v1551
    %v2044 = vpack.c.b16 %v1556, %v1554
    %v2045 = vpack.c.b16 %v1557, %v1555
    %v2046 = vpack.c.b16 %v1560, %v1558
    %v2047 = vpack.c.b16 %v1561, %v1559
    %v2048 = vpack.c.b16 %v1564, %v1562
    %v2049 = vpack.c.b16 %v1565, %v1563
    %v2050 = vpack.c.b16 %v1568, %v1566
    %v2051 = vpack.c.b16 %v1569, %v1567
    %v2052 = vpack.c.b16 %v1572, %v1570
    %v2053 = vpack.c.b16 %v1573, %v1571
    %v2054 = vpack.c.b16 %v1576, %v1574
    %v2055 = vpack.c.b16 %v1577, %v1575
    %v2056 = vpack.c.b16 %v1580, %v1578
    %v2057 = vpack.c.b16 %v1581, %v1579
    %v2058 = vpack.c.b16 %v1584, %v1582
    %v2059 = vpack.c.b16 %v1585, %v1583
    %v2060 = vpack.c.b16 %v1588, %v1586
    %v2061 = vpack.c.b16 %v1589, %v1587
    %v2062 = vpack.c.b16 %v1592, %v1590
    %v2063 = vpack.c.b16 %v1593, %v1591
    %v2064 = vpack.c.b16 %v1596, %v1594
    %v2065 = vpack.c.b16 %v1597, %v1595
    %v2066 = vpack.c.b16 %v1600, %v1598
    %v2067 = vpack.c.b16 %v1601, %v1599
    %v2068 = vpack.c.b16 %v1604, %v1602
    %v2069 = vpack.c.b16 %v1605, %v1603
    %v2070 = vpack.c.b16 %v1608, %v1606
    %v2071 = vpack.c.b16 %v1609, %v1607
    %v2072 = vpack.c.b16 %v1612, %v1610
    %v2073 = vpack.c.b16 %v1613, %v1611
    %v2074 = vpack.c.b16 %v1616, %v1614
    %v2075 = vpack.c.b16 %v1617, %v1615
    %v2076 = vpack.c.b16 %v1620, %v1618
    %v2077 = vpack.c.b16 %v1621, %v1619
    %v2078 = vpack.c.b16 %v1624, %v1622
    %v2079 = vpack.c.b16 %v1625, %v1623
    %v2080 = vpack.c.b16 %v1628, %v1626
    %v2081 = vpack.c.b16 %v1629, %v1627
    %v2082 = vpack.c.b16 %v1632, %v1630
    %v2083 = vpack.c.b16 %v1633, %v1631
    %v2084 = vpack.c.b16 %v1636, %v1634
    %v2085 = vpack.c.b16 %v1637, %v1635
    %v2086 = vpack.c.b16 %v1640, %v1638
    %v2087 = vpack.c.b16 %v1641, %v1639
    %v2088 = vpack.c.b16 %v1644, %v1642
    %v2089 = vpack.c.b16 %v1645, %v1643
    %v2090 = vpack.c.b16 %v1648, %v1646
    %v2091 = vpack.c.b16 %v1649, %v1647
    %v2092 = vpack.c.b16 %v1652, %v1650
    %v2093 = vpack.c.b16 %v1653, %v1651
    %v2094 = vpack.c.b16 %v1656, %v1654
    %v2095 = vpack.c.b16 %v1657, %v1655
    %v2096 = vpack.c.b16 %v1660, %v1658
    %v2097 = vpack.c.b16 %v1661, %v1659
    %v2098 = vpack.c.b16 %v1664, %v1662
    %v2099 = vpack.c.b16 %v1665, %v1663
    %v2100 = vpack.c.b16 %v1668, %v1666
    %v2101 = vpack.c.b16 %v1669, %v1667
    %v2102 = vpack.c.b16 %v1672, %v1670
    %v2103 = vpack.c.b16 %v1673, %v1671
    %v2104 = vpack.c.b16 %v1676, %v1674
    %v2105 = vpack.c.b16 %v1677, %v1675
    %v2106 = vpack.c.b16 %v1680, %v1678
    %v2107 = vpack.c.b16 %v1681, %v1679
    %v2108 = vpack.c.b16 %v1684, %v1682
    %v2109 = vpack.c.b16 %v1685, %v1683
    %v2110 = vpack.c.b16 %v1688, %v1686
    %v2111 = vpack.c.b16 %v1689, %v1687
    %v2112 = vpack.c.b16 %v1692, %v1690
    %v2113 = vpack.c.b16 %v1693, %v1691
    %v2114 = vpack.c.b16 %v1696, %v1694
    %v2115 = vpack.c.b16 %v1697, %v1695
    %v2116 = vpack.c.b16 %v1700, %v1698
    %v2117 = vpack.c.b16 %v1701, %v1699
    %v2118 = vpack.c.b16 %v1704, %v1702
    %v2119 = vpack.c.b16 %v1705, %v1703
    %v2120 = vpack.c.b16 %v1708, %v1706
    %v2121 = vpack.c.b16 %v1709, %v1707
    %v2122 = vpack.c.b16 %v1712, %v1710
    %v2123 = vpack.c.b16 %v1713, %v1711
    %v2124 = vpack.c.b16 %v1716, %v1714
    %v2125 = vpack.c.b16 %v1717, %v1715
    %v2126 = vpack.c.b16 %v1720, %v1718
    %v2127 = vpack.c.b16 %v1721, %v1719
    %v2128 = vpack.c.b16 %v1724, %v1722
    %v2129 = vpack.c.b16 %v1725, %v1723
    %v2130 = vpack.c.b16 %v1728, %v1726
    %v2131 = vpack.c.b16 %v1729, %v1727
    %v2132 = vpack.c.b16 %v1732, %v1730
    %v2133 = vpack.c.b16 %v1733, %v1731
    %v2134 = vpack.c.b16 %v1736, %v1734
    %v2135 = vpack.c.b16 %v1737, %v1735
    %v2136 = vpack.c.b16 %v1740, %v1738
    %v2137 = vpack.c.b16 %v1741, %v1739
    %v2138 = vpack.c.b16 %v1744, %v1742
    %v2139 = vpack.c.b16 %v1745, %v1743
    %v2140 = vpack.c.b16 %v1748, %v1746
    %v2141 = vpack.c.b16 %v1749, %v1747
    %v2142 = vpack.c.b16 %v1752, %v1750
    %v2143 = vpack.c.b16 %v1753, %v1751
    %v2144 = vpack.c.b16 %v1756, %v1754
    %v2145 = vpack.c.b16 %v1757, %v1755
    %v2146 = vpack.c.b16 %v1760, %v1758
    %v2147 = vpack.c.b16 %v1761, %v1759
    %v2148 = vpack.c.b16 %v1764, %v1762
    %v2149 = vpack.c.b16 %v1765, %v1763
    %2534 = vmatpush.bf16.msra.mxu0 %v1780
    %2535 = vmatpush.bf16.msra.mxu0 %v1778
    %2536 = vmatpush.bf16.msra.mxu0 %v1776
    %2537 = vmatpush.bf16.msra.mxu0 %v1774
    %2538 = vmatpush.bf16.msra.mxu0 %v1772
    %2539 = vmatpush.bf16.msra.mxu0 %v1770
    %2540 = vmatpush.bf16.msra.mxu0 %v1768
    %2541 = vmatpush.bf16.msra.mxu0 %v1766
    %2542 = vmatmul.bf16.gmra.mxu0 %v566
    %v2543 = vpop.f32.mrf.mxu0
    %v2544 = vadd.f32 %v526, %v2543
    %v2545 = vpop.f32.mrf.mxu0
    %2546 = vdwg.mxu0
    %2547 = vmatpush.bf16.msra.mxu0 %v1796
    %2548 = vmatpush.bf16.msra.mxu0 %v1794
    %2549 = vmatpush.bf16.msra.mxu0 %v1792
    %2550 = vmatpush.bf16.msra.mxu0 %v1790
    %2551 = vmatpush.bf16.msra.mxu0 %v1788
    %2552 = vmatpush.bf16.msra.mxu0 %v1786
    %2553 = vmatpush.bf16.msra.mxu0 %v1784
    %2554 = vmatpush.bf16.msra.mxu0 %v1782
    %2555 = vmatmul.bf16.gmra.mxu0 %v567
    %v2556 = vpop.f32.mrf.mxu0
    %v2557 = vadd.f32 %v2544, %v2556
    %v2558 = vpop.f32.mrf.mxu0
    %2559 = vdwg.mxu0
    %2560 = vmatpush.bf16.msra.mxu0 %v1812
    %2561 = vmatpush.bf16.msra.mxu0 %v1810
    %2562 = vmatpush.bf16.msra.mxu0 %v1808
    %2563 = vmatpush.bf16.msra.mxu0 %v1806
    %2564 = vmatpush.bf16.msra.mxu0 %v1804
    %2565 = vmatpush.bf16.msra.mxu0 %v1802
    %2566 = vmatpush.bf16.msra.mxu0 %v1800
    %2567 = vmatpush.bf16.msra.mxu0 %v1798
    %2568 = vmatmul.bf16.gmra.mxu0 %v568
    %v2569 = vpop.f32.mrf.mxu0
    %v2570 = vadd.f32 %v2557, %v2569
    %v2571 = vpop.f32.mrf.mxu0
    %2572 = vdwg.mxu0
    %2573 = vmatpush.bf16.msra.mxu0 %v1828
    %2574 = vmatpush.bf16.msra.mxu0 %v1826
    %2575 = vmatpush.bf16.msra.mxu0 %v1824
    %2576 = vmatpush.bf16.msra.mxu0 %v1822
    %2577 = vmatpush.bf16.msra.mxu0 %v1820
    %2578 = vmatpush.bf16.msra.mxu0 %v1818
    %2579 = vmatpush.bf16.msra.mxu0 %v1816
    %2580 = vmatpush.bf16.msra.mxu0 %v1814
    %2581 = vmatmul.bf16.gmra.mxu0 %v569
    %v2582 = vpop.f32.mrf.mxu0
    %v2583 = vadd.f32 %v2570, %v2582
    %v2584 = vpop.f32.mrf.mxu0
    %2585 = vdwg.mxu0
    %2586 = vmatpush.bf16.msra.mxu0 %v1844
    %2587 = vmatpush.bf16.msra.mxu0 %v1842
    %2588 = vmatpush.bf16.msra.mxu0 %v1840
    %2589 = vmatpush.bf16.msra.mxu0 %v1838
    %2590 = vmatpush.bf16.msra.mxu0 %v1836
    %2591 = vmatpush.bf16.msra.mxu0 %v1834
    %2592 = vmatpush.bf16.msra.mxu0 %v1832
    %2593 = vmatpush.bf16.msra.mxu0 %v1830
    %2594 = vmatmul.bf16.gmra.mxu0 %v570
    %v2595 = vpop.f32.mrf.mxu0
    %v2596 = vadd.f32 %v2583, %v2595
    %v2597 = vpop.f32.mrf.mxu0
    %2598 = vdwg.mxu0
    %2599 = vmatpush.bf16.msra.mxu0 %v1860
    %2600 = vmatpush.bf16.msra.mxu0 %v1858
    %2601 = vmatpush.bf16.msra.mxu0 %v1856
    %2602 = vmatpush.bf16.msra.mxu0 %v1854
    %2603 = vmatpush.bf16.msra.mxu0 %v1852
    %2604 = vmatpush.bf16.msra.mxu0 %v1850
    %2605 = vmatpush.bf16.msra.mxu0 %v1848
    %2606 = vmatpush.bf16.msra.mxu0 %v1846
    %2607 = vmatmul.bf16.gmra.mxu0 %v571
    %v2608 = vpop.f32.mrf.mxu0
    %v2609 = vadd.f32 %v2596, %v2608
    %v2610 = vpop.f32.mrf.mxu0
    %2611 = vdwg.mxu0
    %2612 = vmatpush.bf16.msra.mxu0 %v1876
    %2613 = vmatpush.bf16.msra.mxu0 %v1874
    %2614 = vmatpush.bf16.msra.mxu0 %v1872
    %2615 = vmatpush.bf16.msra.mxu0 %v1870
    %2616 = vmatpush.bf16.msra.mxu0 %v1868
    %2617 = vmatpush.bf16.msra.mxu0 %v1866
    %2618 = vmatpush.bf16.msra.mxu0 %v1864
    %2619 = vmatpush.bf16.msra.mxu0 %v1862
    %2620 = vmatmul.bf16.gmra.mxu0 %v572
    %v2621 = vpop.f32.mrf.mxu0
    %v2622 = vadd.f32 %v2609, %v2621
    %v2623 = vpop.f32.mrf.mxu0
    %2624 = vdwg.mxu0
    %2625 = vmatpush.bf16.msra.mxu0 %v1892
    %2626 = vmatpush.bf16.msra.mxu0 %v1890
    %2627 = vmatpush.bf16.msra.mxu0 %v1888
    %2628 = vmatpush.bf16.msra.mxu0 %v1886
    %2629 = vmatpush.bf16.msra.mxu0 %v1884
    %2630 = vmatpush.bf16.msra.mxu0 %v1882
    %2631 = vmatpush.bf16.msra.mxu0 %v1880
    %2632 = vmatpush.bf16.msra.mxu0 %v1878
    %2633 = vmatmul.bf16.gmra.mxu0 %v573
    %v2634 = vpop.f32.mrf.mxu0
    %v2635 = vadd.f32 %v2622, %v2634
    %v2636 = vpop.f32.mrf.mxu0
    %2637 = vdwg.mxu0
    %2638 = vmatpush.bf16.msra.mxu0 %v1908
    %2639 = vmatpush.bf16.msra.mxu0 %v1906
    %2640 = vmatpush.bf16.msra.mxu0 %v1904
    %2641 = vmatpush.bf16.msra.mxu0 %v1902
    %2642 = vmatpush.bf16.msra.mxu0 %v1900
    %2643 = vmatpush.bf16.msra.mxu0 %v1898
    %2644 = vmatpush.bf16.msra.mxu0 %v1896
    %2645 = vmatpush.bf16.msra.mxu0 %v1894
    %2646 = vmatmul.bf16.gmra.mxu0 %v574
    %v2647 = vpop.f32.mrf.mxu0
    %v2648 = vadd.f32 %v2635, %v2647
    %v2649 = vpop.f32.mrf.mxu0
    %2650 = vdwg.mxu0
    %2651 = vmatpush.bf16.msra.mxu0 %v1924
    %2652 = vmatpush.bf16.msra.mxu0 %v1922
    %2653 = vmatpush.bf16.msra.mxu0 %v1920
    %2654 = vmatpush.bf16.msra.mxu0 %v1918
    %2655 = vmatpush.bf16.msra.mxu0 %v1916
    %2656 = vmatpush.bf16.msra.mxu0 %v1914
    %2657 = vmatpush.bf16.msra.mxu0 %v1912
    %2658 = vmatpush.bf16.msra.mxu0 %v1910
    %2659 = vmatmul.bf16.gmra.mxu0 %v575
    %v2660 = vpop.f32.mrf.mxu0
    %v2661 = vadd.f32 %v2648, %v2660
    %v2662 = vpop.f32.mrf.mxu0
    %2663 = vdwg.mxu0
    %2664 = vmatpush.bf16.msra.mxu0 %v1940
    %2665 = vmatpush.bf16.msra.mxu0 %v1938
    %2666 = vmatpush.bf16.msra.mxu0 %v1936
    %2667 = vmatpush.bf16.msra.mxu0 %v1934
    %2668 = vmatpush.bf16.msra.mxu0 %v1932
    %2669 = vmatpush.bf16.msra.mxu0 %v1930
    %2670 = vmatpush.bf16.msra.mxu0 %v1928
    %2671 = vmatpush.bf16.msra.mxu0 %v1926
    %2672 = vmatmul.bf16.gmra.mxu0 %v576
    %v2673 = vpop.f32.mrf.mxu0
    %v2674 = vadd.f32 %v2661, %v2673
    %v2675 = vpop.f32.mrf.mxu0
    %2676 = vdwg.mxu0
    %2677 = vmatpush.bf16.msra.mxu0 %v1956
    %2678 = vmatpush.bf16.msra.mxu0 %v1954
    %2679 = vmatpush.bf16.msra.mxu0 %v1952
    %2680 = vmatpush.bf16.msra.mxu0 %v1950
    %2681 = vmatpush.bf16.msra.mxu0 %v1948
    %2682 = vmatpush.bf16.msra.mxu0 %v1946
    %2683 = vmatpush.bf16.msra.mxu0 %v1944
    %2684 = vmatpush.bf16.msra.mxu0 %v1942
    %2685 = vmatmul.bf16.gmra.mxu0 %v577
    %v2686 = vpop.f32.mrf.mxu0
    %v2687 = vadd.f32 %v2674, %v2686
    %v2688 = vpop.f32.mrf.mxu0
    %2689 = vdwg.mxu0
    %2690 = vmatpush.bf16.msra.mxu0 %v1972
    %2691 = vmatpush.bf16.msra.mxu0 %v1970
    %2692 = vmatpush.bf16.msra.mxu0 %v1968
    %2693 = vmatpush.bf16.msra.mxu0 %v1966
    %2694 = vmatpush.bf16.msra.mxu0 %v1964
    %2695 = vmatpush.bf16.msra.mxu0 %v1962
    %2696 = vmatpush.bf16.msra.mxu0 %v1960
    %2697 = vmatpush.bf16.msra.mxu0 %v1958
    %2698 = vmatmul.bf16.gmra.mxu0 %v578
    %v2699 = vpop.f32.mrf.mxu0
    %v2700 = vadd.f32 %v2687, %v2699
    %v2701 = vpop.f32.mrf.mxu0
    %2702 = vdwg.mxu0
    %2703 = vmatpush.bf16.msra.mxu0 %v1988
    %2704 = vmatpush.bf16.msra.mxu0 %v1986
    %2705 = vmatpush.bf16.msra.mxu0 %v1984
    %2706 = vmatpush.bf16.msra.mxu0 %v1982
    %2707 = vmatpush.bf16.msra.mxu0 %v1980
    %2708 = vmatpush.bf16.msra.mxu0 %v1978
    %2709 = vmatpush.bf16.msra.mxu0 %v1976
    %2710 = vmatpush.bf16.msra.mxu0 %v1974
    %2711 = vmatmul.bf16.gmra.mxu0 %v579
    %v2712 = vpop.f32.mrf.mxu0
    %v2713 = vadd.f32 %v2700, %v2712
    %v2714 = vpop.f32.mrf.mxu0
    %2715 = vdwg.mxu0
    %2716 = vmatpush.bf16.msra.mxu0 %v2004
    %2717 = vmatpush.bf16.msra.mxu0 %v2002
    %2718 = vmatpush.bf16.msra.mxu0 %v2000
    %2719 = vmatpush.bf16.msra.mxu0 %v1998
    %2720 = vmatpush.bf16.msra.mxu0 %v1996
    %2721 = vmatpush.bf16.msra.mxu0 %v1994
    %2722 = vmatpush.bf16.msra.mxu0 %v1992
    %2723 = vmatpush.bf16.msra.mxu0 %v1990
    %2724 = vmatmul.bf16.gmra.mxu0 %v580
    %v2725 = vpop.f32.mrf.mxu0
    %v2726 = vadd.f32 %v2713, %v2725
    %v2727 = vpop.f32.mrf.mxu0
    %2728 = vdwg.mxu0
    %2729 = vmatpush.bf16.msra.mxu0 %v2020
    %2730 = vmatpush.bf16.msra.mxu0 %v2018
    %2731 = vmatpush.bf16.msra.mxu0 %v2016
    %2732 = vmatpush.bf16.msra.mxu0 %v2014
    %2733 = vmatpush.bf16.msra.mxu0 %v2012
    %2734 = vmatpush.bf16.msra.mxu0 %v2010
    %2735 = vmatpush.bf16.msra.mxu0 %v2008
    %2736 = vmatpush.bf16.msra.mxu0 %v2006
    %2737 = vmatmul.bf16.gmra.mxu0 %v581
    %v2738 = vpop.f32.mrf.mxu0
    %v2739 = vadd.f32 %v2726, %v2738
    %v2740 = vpop.f32.mrf.mxu0
    %2741 = vdwg.mxu0
    %2742 = vmatpush.bf16.msra.mxu0 %v2036
    %2743 = vmatpush.bf16.msra.mxu0 %v2034
    %2744 = vmatpush.bf16.msra.mxu0 %v2032
    %2745 = vmatpush.bf16.msra.mxu0 %v2030
    %2746 = vmatpush.bf16.msra.mxu0 %v2028
    %2747 = vmatpush.bf16.msra.mxu0 %v2026
    %2748 = vmatpush.bf16.msra.mxu0 %v2024
    %2749 = vmatpush.bf16.msra.mxu0 %v2022
    %2750 = vmatmul.bf16.gmra.mxu0 %v582
    %v2751 = vpop.f32.mrf.mxu0
    %v2752 = vadd.f32 %v2739, %v2751
    %v2753 = vpop.f32.mrf.mxu0
    %2754 = vdwg.mxu0
    %2755 = vmatpush.bf16.msra.mxu0 %v2052
    %2756 = vmatpush.bf16.msra.mxu0 %v2050
    %2757 = vmatpush.bf16.msra.mxu0 %v2048
    %2758 = vmatpush.bf16.msra.mxu0 %v2046
    %2759 = vmatpush.bf16.msra.mxu0 %v2044
    %2760 = vmatpush.bf16.msra.mxu0 %v2042
    %2761 = vmatpush.bf16.msra.mxu0 %v2040
    %2762 = vmatpush.bf16.msra.mxu0 %v2038
    %2763 = vmatmul.bf16.gmra.mxu0 %v583
    %v2764 = vpop.f32.mrf.mxu0
    %v2765 = vadd.f32 %v2752, %v2764
    %v2766 = vpop.f32.mrf.mxu0
    %2767 = vdwg.mxu0
    %2768 = vmatpush.bf16.msra.mxu0 %v2068
    %2769 = vmatpush.bf16.msra.mxu0 %v2066
    %2770 = vmatpush.bf16.msra.mxu0 %v2064
    %2771 = vmatpush.bf16.msra.mxu0 %v2062
    %2772 = vmatpush.bf16.msra.mxu0 %v2060
    %2773 = vmatpush.bf16.msra.mxu0 %v2058
    %2774 = vmatpush.bf16.msra.mxu0 %v2056
    %2775 = vmatpush.bf16.msra.mxu0 %v2054
    %2776 = vmatmul.bf16.gmra.mxu0 %v584
    %v2777 = vpop.f32.mrf.mxu0
    %v2778 = vadd.f32 %v2765, %v2777
    %v2779 = vpop.f32.mrf.mxu0
    %2780 = vdwg.mxu0
    %2781 = vmatpush.bf16.msra.mxu0 %v2084
    %2782 = vmatpush.bf16.msra.mxu0 %v2082
    %2783 = vmatpush.bf16.msra.mxu0 %v2080
    %2784 = vmatpush.bf16.msra.mxu0 %v2078
    %2785 = vmatpush.bf16.msra.mxu0 %v2076
    %2786 = vmatpush.bf16.msra.mxu0 %v2074
    %2787 = vmatpush.bf16.msra.mxu0 %v2072
    %2788 = vmatpush.bf16.msra.mxu0 %v2070
    %2789 = vmatmul.bf16.gmra.mxu0 %v585
    %v2790 = vpop.f32.mrf.mxu0
    %v2791 = vadd.f32 %v2778, %v2790
    %v2792 = vpop.f32.mrf.mxu0
    %2793 = vdwg.mxu0
    %2794 = vmatpush.bf16.msra.mxu0 %v2100
    %2795 = vmatpush.bf16.msra.mxu0 %v2098
    %2796 = vmatpush.bf16.msra.mxu0 %v2096
    %2797 = vmatpush.bf16.msra.mxu0 %v2094
    %2798 = vmatpush.bf16.msra.mxu0 %v2092
    %2799 = vmatpush.bf16.msra.mxu0 %v2090
    %2800 = vmatpush.bf16.msra.mxu0 %v2088
    %2801 = vmatpush.bf16.msra.mxu0 %v2086
    %2802 = vmatmul.bf16.gmra.mxu0 %v586
    %v2803 = vpop.f32.mrf.mxu0
    %v2804 = vadd.f32 %v2791, %v2803
    %v2805 = vpop.f32.mrf.mxu0
    %2806 = vdwg.mxu0
    %2807 = vmatpush.bf16.msra.mxu0 %v2116
    %2808 = vmatpush.bf16.msra.mxu0 %v2114
    %2809 = vmatpush.bf16.msra.mxu0 %v2112
    %2810 = vmatpush.bf16.msra.mxu0 %v2110
    %2811 = vmatpush.bf16.msra.mxu0 %v2108
    %2812 = vmatpush.bf16.msra.mxu0 %v2106
    %2813 = vmatpush.bf16.msra.mxu0 %v2104
    %2814 = vmatpush.bf16.msra.mxu0 %v2102
    %2815 = vmatmul.bf16.gmra.mxu0 %v587
    %v2816 = vpop.f32.mrf.mxu0
    %v2817 = vadd.f32 %v2804, %v2816
    %v2818 = vpop.f32.mrf.mxu0
    %2819 = vdwg.mxu0
    %2820 = vmatpush.bf16.msra.mxu0 %v2132
    %2821 = vmatpush.bf16.msra.mxu0 %v2130
    %2822 = vmatpush.bf16.msra.mxu0 %v2128
    %2823 = vmatpush.bf16.msra.mxu0 %v2126
    %2824 = vmatpush.bf16.msra.mxu0 %v2124
    %2825 = vmatpush.bf16.msra.mxu0 %v2122
    %2826 = vmatpush.bf16.msra.mxu0 %v2120
    %2827 = vmatpush.bf16.msra.mxu0 %v2118
    %2828 = vmatmul.bf16.gmra.mxu0 %v588
    %v2829 = vpop.f32.mrf.mxu0
    %v2830 = vadd.f32 %v2817, %v2829
    %v2831 = vpop.f32.mrf.mxu0
    %2832 = vdwg.mxu0
    %2833 = vmatpush.bf16.msra.mxu0 %v2148
    %2834 = vmatpush.bf16.msra.mxu0 %v2146
    %2835 = vmatpush.bf16.msra.mxu0 %v2144
    %2836 = vmatpush.bf16.msra.mxu0 %v2142
    %2837 = vmatpush.bf16.msra.mxu0 %v2140
    %2838 = vmatpush.bf16.msra.mxu0 %v2138
    %2839 = vmatpush.bf16.msra.mxu0 %v2136
    %2840 = vmatpush.bf16.msra.mxu0 %v2134
    %2841 = vmatmul.bf16.gmra.mxu0 %v589
    %v2842 = vpop.f32.mrf.mxu0
    %v2843 = vadd.f32 %v2830, %v2842
    %v2844 = vpop.f32.mrf.mxu0
    %2845 = vdwg.mxu0
    %2846 = vmatpush.bf16.msra.mxu0 %v1781
    %2847 = vmatpush.bf16.msra.mxu0 %v1779
    %2848 = vmatpush.bf16.msra.mxu0 %v1777
    %2849 = vmatpush.bf16.msra.mxu0 %v1775
    %2850 = vmatpush.bf16.msra.mxu0 %v1773
    %2851 = vmatpush.bf16.msra.mxu0 %v1771
    %2852 = vmatpush.bf16.msra.mxu0 %v1769
    %2853 = vmatpush.bf16.msra.mxu0 %v1767
    %2854 = vmatmul.bf16.gmra.mxu0 %v566
    %v2855 = vpop.f32.mrf.mxu0
    %v2856 = vadd.f32 %v527, %v2855
    %v2857 = vpop.f32.mrf.mxu0
    %2858 = vdwg.mxu0
    %2859 = vmatpush.bf16.msra.mxu0 %v1797
    %2860 = vmatpush.bf16.msra.mxu0 %v1795
    %2861 = vmatpush.bf16.msra.mxu0 %v1793
    %2862 = vmatpush.bf16.msra.mxu0 %v1791
    %2863 = vmatpush.bf16.msra.mxu0 %v1789
    %2864 = vmatpush.bf16.msra.mxu0 %v1787
    %2865 = vmatpush.bf16.msra.mxu0 %v1785
    %2866 = vmatpush.bf16.msra.mxu0 %v1783
    %2867 = vmatmul.bf16.gmra.mxu0 %v567
    %v2868 = vpop.f32.mrf.mxu0
    %v2869 = vadd.f32 %v2856, %v2868
    %v2870 = vpop.f32.mrf.mxu0
    %2871 = vdwg.mxu0
    %2872 = vmatpush.bf16.msra.mxu0 %v1813
    %2873 = vmatpush.bf16.msra.mxu0 %v1811
    %2874 = vmatpush.bf16.msra.mxu0 %v1809
    %2875 = vmatpush.bf16.msra.mxu0 %v1807
    %2876 = vmatpush.bf16.msra.mxu0 %v1805
    %2877 = vmatpush.bf16.msra.mxu0 %v1803
    %2878 = vmatpush.bf16.msra.mxu0 %v1801
    %2879 = vmatpush.bf16.msra.mxu0 %v1799
    %2880 = vmatmul.bf16.gmra.mxu0 %v568
    %v2881 = vpop.f32.mrf.mxu0
    %v2882 = vadd.f32 %v2869, %v2881
    %v2883 = vpop.f32.mrf.mxu0
    %2884 = vdwg.mxu0
    %2885 = vmatpush.bf16.msra.mxu0 %v1829
    %2886 = vmatpush.bf16.msra.mxu0 %v1827
    %2887 = vmatpush.bf16.msra.mxu0 %v1825
    %2888 = vmatpush.bf16.msra.mxu0 %v1823
    %2889 = vmatpush.bf16.msra.mxu0 %v1821
    %2890 = vmatpush.bf16.msra.mxu0 %v1819
    %2891 = vmatpush.bf16.msra.mxu0 %v1817
    %2892 = vmatpush.bf16.msra.mxu0 %v1815
    %2893 = vmatmul.bf16.gmra.mxu0 %v569
    %v2894 = vpop.f32.mrf.mxu0
    %v2895 = vadd.f32 %v2882, %v2894
    %v2896 = vpop.f32.mrf.mxu0
    %2897 = vdwg.mxu0
    %2898 = vmatpush.bf16.msra.mxu0 %v1845
    %2899 = vmatpush.bf16.msra.mxu0 %v1843
    %2900 = vmatpush.bf16.msra.mxu0 %v1841
    %2901 = vmatpush.bf16.msra.mxu0 %v1839
    %2902 = vmatpush.bf16.msra.mxu0 %v1837
    %2903 = vmatpush.bf16.msra.mxu0 %v1835
    %2904 = vmatpush.bf16.msra.mxu0 %v1833
    %2905 = vmatpush.bf16.msra.mxu0 %v1831
    %2906 = vmatmul.bf16.gmra.mxu0 %v570
    %v2907 = vpop.f32.mrf.mxu0
    %v2908 = vadd.f32 %v2895, %v2907
    %v2909 = vpop.f32.mrf.mxu0
    %2910 = vdwg.mxu0
    %2911 = vmatpush.bf16.msra.mxu0 %v1861
    %2912 = vmatpush.bf16.msra.mxu0 %v1859
    %2913 = vmatpush.bf16.msra.mxu0 %v1857
    %2914 = vmatpush.bf16.msra.mxu0 %v1855
    %2915 = vmatpush.bf16.msra.mxu0 %v1853
    %2916 = vmatpush.bf16.msra.mxu0 %v1851
    %2917 = vmatpush.bf16.msra.mxu0 %v1849
    %2918 = vmatpush.bf16.msra.mxu0 %v1847
    %2919 = vmatmul.bf16.gmra.mxu0 %v571
    %v2920 = vpop.f32.mrf.mxu0
    %v2921 = vadd.f32 %v2908, %v2920
    %v2922 = vpop.f32.mrf.mxu0
    %2923 = vdwg.mxu0
    %2924 = vmatpush.bf16.msra.mxu0 %v1877
    %2925 = vmatpush.bf16.msra.mxu0 %v1875
    %2926 = vmatpush.bf16.msra.mxu0 %v1873
    %2927 = vmatpush.bf16.msra.mxu0 %v1871
    %2928 = vmatpush.bf16.msra.mxu0 %v1869
    %2929 = vmatpush.bf16.msra.mxu0 %v1867
    %2930 = vmatpush.bf16.msra.mxu0 %v1865
    %2931 = vmatpush.bf16.msra.mxu0 %v1863
    %2932 = vmatmul.bf16.gmra.mxu0 %v572
    %v2933 = vpop.f32.mrf.mxu0
    %v2934 = vadd.f32 %v2921, %v2933
    %v2935 = vpop.f32.mrf.mxu0
    %2936 = vdwg.mxu0
    %2937 = vmatpush.bf16.msra.mxu0 %v1893
    %2938 = vmatpush.bf16.msra.mxu0 %v1891
    %2939 = vmatpush.bf16.msra.mxu0 %v1889
    %2940 = vmatpush.bf16.msra.mxu0 %v1887
    %2941 = vmatpush.bf16.msra.mxu0 %v1885
    %2942 = vmatpush.bf16.msra.mxu0 %v1883
    %2943 = vmatpush.bf16.msra.mxu0 %v1881
    %2944 = vmatpush.bf16.msra.mxu0 %v1879
    %2945 = vmatmul.bf16.gmra.mxu0 %v573
    %v2946 = vpop.f32.mrf.mxu0
    %v2947 = vadd.f32 %v2934, %v2946
    %v2948 = vpop.f32.mrf.mxu0
    %2949 = vdwg.mxu0
    %2950 = vmatpush.bf16.msra.mxu0 %v1909
    %2951 = vmatpush.bf16.msra.mxu0 %v1907
    %2952 = vmatpush.bf16.msra.mxu0 %v1905
    %2953 = vmatpush.bf16.msra.mxu0 %v1903
    %2954 = vmatpush.bf16.msra.mxu0 %v1901
    %2955 = vmatpush.bf16.msra.mxu0 %v1899
    %2956 = vmatpush.bf16.msra.mxu0 %v1897
    %2957 = vmatpush.bf16.msra.mxu0 %v1895
    %2958 = vmatmul.bf16.gmra.mxu0 %v574
    %v2959 = vpop.f32.mrf.mxu0
    %v2960 = vadd.f32 %v2947, %v2959
    %v2961 = vpop.f32.mrf.mxu0
    %2962 = vdwg.mxu0
    %2963 = vmatpush.bf16.msra.mxu0 %v1925
    %2964 = vmatpush.bf16.msra.mxu0 %v1923
    %2965 = vmatpush.bf16.msra.mxu0 %v1921
    %2966 = vmatpush.bf16.msra.mxu0 %v1919
    %2967 = vmatpush.bf16.msra.mxu0 %v1917
    %2968 = vmatpush.bf16.msra.mxu0 %v1915
    %2969 = vmatpush.bf16.msra.mxu0 %v1913
    %2970 = vmatpush.bf16.msra.mxu0 %v1911
    %2971 = vmatmul.bf16.gmra.mxu0 %v575
    %v2972 = vpop.f32.mrf.mxu0
    %v2973 = vadd.f32 %v2960, %v2972
    %v2974 = vpop.f32.mrf.mxu0
    %2975 = vdwg.mxu0
    %2976 = vmatpush.bf16.msra.mxu0 %v1941
    %2977 = vmatpush.bf16.msra.mxu0 %v1939
    %2978 = vmatpush.bf16.msra.mxu0 %v1937
    %2979 = vmatpush.bf16.msra.mxu0 %v1935
    %2980 = vmatpush.bf16.msra.mxu0 %v1933
    %2981 = vmatpush.bf16.msra.mxu0 %v1931
    %2982 = vmatpush.bf16.msra.mxu0 %v1929
    %2983 = vmatpush.bf16.msra.mxu0 %v1927
    %2984 = vmatmul.bf16.gmra.mxu0 %v576
    %v2985 = vpop.f32.mrf.mxu0
    %v2986 = vadd.f32 %v2973, %v2985
    %v2987 = vpop.f32.mrf.mxu0
    %2988 = vdwg.mxu0
    %2989 = vmatpush.bf16.msra.mxu0 %v1957
    %2990 = vmatpush.bf16.msra.mxu0 %v1955
    %2991 = vmatpush.bf16.msra.mxu0 %v1953
    %2992 = vmatpush.bf16.msra.mxu0 %v1951
    %2993 = vmatpush.bf16.msra.mxu0 %v1949
    %2994 = vmatpush.bf16.msra.mxu0 %v1947
    %2995 = vmatpush.bf16.msra.mxu0 %v1945
    %2996 = vmatpush.bf16.msra.mxu0 %v1943
    %2997 = vmatmul.bf16.gmra.mxu0 %v577
    %v2998 = vpop.f32.mrf.mxu0
    %v2999 = vadd.f32 %v2986, %v2998
    %v3000 = vpop.f32.mrf.mxu0
    %3001 = vdwg.mxu0
    %3002 = vmatpush.bf16.msra.mxu0 %v1973
    %3003 = vmatpush.bf16.msra.mxu0 %v1971
    %3004 = vmatpush.bf16.msra.mxu0 %v1969
    %3005 = vmatpush.bf16.msra.mxu0 %v1967
    %3006 = vmatpush.bf16.msra.mxu0 %v1965
    %3007 = vmatpush.bf16.msra.mxu0 %v1963
    %3008 = vmatpush.bf16.msra.mxu0 %v1961
    %3009 = vmatpush.bf16.msra.mxu0 %v1959
    %3010 = vmatmul.bf16.gmra.mxu0 %v578
    %v3011 = vpop.f32.mrf.mxu0
    %v3012 = vadd.f32 %v2999, %v3011
    %v3013 = vpop.f32.mrf.mxu0
    %3014 = vdwg.mxu0
    %3015 = vmatpush.bf16.msra.mxu0 %v1989
    %3016 = vmatpush.bf16.msra.mxu0 %v1987
    %3017 = vmatpush.bf16.msra.mxu0 %v1985
    %3018 = vmatpush.bf16.msra.mxu0 %v1983
    %3019 = vmatpush.bf16.msra.mxu0 %v1981
    %3020 = vmatpush.bf16.msra.mxu0 %v1979
    %3021 = vmatpush.bf16.msra.mxu0 %v1977
    %3022 = vmatpush.bf16.msra.mxu0 %v1975
    %3023 = vmatmul.bf16.gmra.mxu0 %v579
    %v3024 = vpop.f32.mrf.mxu0
    %v3025 = vadd.f32 %v3012, %v3024
    %v3026 = vpop.f32.mrf.mxu0
    %3027 = vdwg.mxu0
    %3028 = vmatpush.bf16.msra.mxu0 %v2005
    %3029 = vmatpush.bf16.msra.mxu0 %v2003
    %3030 = vmatpush.bf16.msra.mxu0 %v2001
    %3031 = vmatpush.bf16.msra.mxu0 %v1999
    %3032 = vmatpush.bf16.msra.mxu0 %v1997
    %3033 = vmatpush.bf16.msra.mxu0 %v1995
    %3034 = vmatpush.bf16.msra.mxu0 %v1993
    %3035 = vmatpush.bf16.msra.mxu0 %v1991
    %3036 = vmatmul.bf16.gmra.mxu0 %v580
    %v3037 = vpop.f32.mrf.mxu0
    %v3038 = vadd.f32 %v3025, %v3037
    %v3039 = vpop.f32.mrf.mxu0
    %3040 = vdwg.mxu0
    %3041 = vmatpush.bf16.msra.mxu0 %v2021
    %3042 = vmatpush.bf16.msra.mxu0 %v2019
    %3043 = vmatpush.bf16.msra.mxu0 %v2017
    %3044 = vmatpush.bf16.msra.mxu0 %v2015
    %3045 = vmatpush.bf16.msra.mxu0 %v2013
    %3046 = vmatpush.bf16.msra.mxu0 %v2011
    %3047 = vmatpush.bf16.msra.mxu0 %v2009
    %3048 = vmatpush.bf16.msra.mxu0 %v2007
    %3049 = vmatmul.bf16.gmra.mxu0 %v581
    %v3050 = vpop.f32.mrf.mxu0
    %v3051 = vadd.f32 %v3038, %v3050
    %v3052 = vpop.f32.mrf.mxu0
    %3053 = vdwg.mxu0
    %3054 = vmatpush.bf16.msra.mxu0 %v2037
    %3055 = vmatpush.bf16.msra.mxu0 %v2035
    %3056 = vmatpush.bf16.msra.mxu0 %v2033
    %3057 = vmatpush.bf16.msra.mxu0 %v2031
    %3058 = vmatpush.bf16.msra.mxu0 %v2029
    %3059 = vmatpush.bf16.msra.mxu0 %v2027
    %3060 = vmatpush.bf16.msra.mxu0 %v2025
    %3061 = vmatpush.bf16.msra.mxu0 %v2023
    %3062 = vmatmul.bf16.gmra.mxu0 %v582
    %v3063 = vpop.f32.mrf.mxu0
    %v3064 = vadd.f32 %v3051, %v3063
    %v3065 = vpop.f32.mrf.mxu0
    %3066 = vdwg.mxu0
    %3067 = vmatpush.bf16.msra.mxu0 %v2053
    %3068 = vmatpush.bf16.msra.mxu0 %v2051
    %3069 = vmatpush.bf16.msra.mxu0 %v2049
    %3070 = vmatpush.bf16.msra.mxu0 %v2047
    %3071 = vmatpush.bf16.msra.mxu0 %v2045
    %3072 = vmatpush.bf16.msra.mxu0 %v2043
    %3073 = vmatpush.bf16.msra.mxu0 %v2041
    %3074 = vmatpush.bf16.msra.mxu0 %v2039
    %3075 = vmatmul.bf16.gmra.mxu0 %v583
    %v3076 = vpop.f32.mrf.mxu0
    %v3077 = vadd.f32 %v3064, %v3076
    %v3078 = vpop.f32.mrf.mxu0
    %3079 = vdwg.mxu0
    %3080 = vmatpush.bf16.msra.mxu0 %v2069
    %3081 = vmatpush.bf16.msra.mxu0 %v2067
    %3082 = vmatpush.bf16.msra.mxu0 %v2065
    %3083 = vmatpush.bf16.msra.mxu0 %v2063
    %3084 = vmatpush.bf16.msra.mxu0 %v2061
    %3085 = vmatpush.bf16.msra.mxu0 %v2059
    %3086 = vmatpush.bf16.msra.mxu0 %v2057
    %3087 = vmatpush.bf16.msra.mxu0 %v2055
    %3088 = vmatmul.bf16.gmra.mxu0 %v584
    %v3089 = vpop.f32.mrf.mxu0
    %v3090 = vadd.f32 %v3077, %v3089
    %v3091 = vpop.f32.mrf.mxu0
    %3092 = vdwg.mxu0
    %3093 = vmatpush.bf16.msra.mxu0 %v2085
    %3094 = vmatpush.bf16.msra.mxu0 %v2083
    %3095 = vmatpush.bf16.msra.mxu0 %v2081
    %3096 = vmatpush.bf16.msra.mxu0 %v2079
    %3097 = vmatpush.bf16.msra.mxu0 %v2077
    %3098 = vmatpush.bf16.msra.mxu0 %v2075
    %3099 = vmatpush.bf16.msra.mxu0 %v2073
    %3100 = vmatpush.bf16.msra.mxu0 %v2071
    %3101 = vmatmul.bf16.gmra.mxu0 %v585
    %v3102 = vpop.f32.mrf.mxu0
    %v3103 = vadd.f32 %v3090, %v3102
    %v3104 = vpop.f32.mrf.mxu0
    %3105 = vdwg.mxu0
    %3106 = vmatpush.bf16.msra.mxu0 %v2101
    %3107 = vmatpush.bf16.msra.mxu0 %v2099
    %3108 = vmatpush.bf16.msra.mxu0 %v2097
    %3109 = vmatpush.bf16.msra.mxu0 %v2095
    %3110 = vmatpush.bf16.msra.mxu0 %v2093
    %3111 = vmatpush.bf16.msra.mxu0 %v2091
    %3112 = vmatpush.bf16.msra.mxu0 %v2089
    %3113 = vmatpush.bf16.msra.mxu0 %v2087
    %3114 = vmatmul.bf16.gmra.mxu0 %v586
    %v3115 = vpop.f32.mrf.mxu0
    %v3116 = vadd.f32 %v3103, %v3115
    %v3117 = vpop.f32.mrf.mxu0
    %3118 = vdwg.mxu0
    %3119 = vmatpush.bf16.msra.mxu0 %v2117
    %3120 = vmatpush.bf16.msra.mxu0 %v2115
    %3121 = vmatpush.bf16.msra.mxu0 %v2113
    %3122 = vmatpush.bf16.msra.mxu0 %v2111
    %3123 = vmatpush.bf16.msra.mxu0 %v2109
    %3124 = vmatpush.bf16.msra.mxu0 %v2107
    %3125 = vmatpush.bf16.msra.mxu0 %v2105
    %3126 = vmatpush.bf16.msra.mxu0 %v2103
    %3127 = vmatmul.bf16.gmra.mxu0 %v587
    %v3128 = vpop.f32.mrf.mxu0
    %v3129 = vadd.f32 %v3116, %v3128
    %v3130 = vpop.f32.mrf.mxu0
    %3131 = vdwg.mxu0
    %3132 = vmatpush.bf16.msra.mxu0 %v2133
    %3133 = vmatpush.bf16.msra.mxu0 %v2131
    %3134 = vmatpush.bf16.msra.mxu0 %v2129
    %3135 = vmatpush.bf16.msra.mxu0 %v2127
    %3136 = vmatpush.bf16.msra.mxu0 %v2125
    %3137 = vmatpush.bf16.msra.mxu0 %v2123
    %3138 = vmatpush.bf16.msra.mxu0 %v2121
    %3139 = vmatpush.bf16.msra.mxu0 %v2119
    %3140 = vmatmul.bf16.gmra.mxu0 %v588
    %v3141 = vpop.f32.mrf.mxu0
    %v3142 = vadd.f32 %v3129, %v3141
    %v3143 = vpop.f32.mrf.mxu0
    %3144 = vdwg.mxu0
    %3145 = vmatpush.bf16.msra.mxu0 %v2149
    %3146 = vmatpush.bf16.msra.mxu0 %v2147
    %3147 = vmatpush.bf16.msra.mxu0 %v2145
    %3148 = vmatpush.bf16.msra.mxu0 %v2143
    %3149 = vmatpush.bf16.msra.mxu0 %v2141
    %3150 = vmatpush.bf16.msra.mxu0 %v2139
    %3151 = vmatpush.bf16.msra.mxu0 %v2137
    %3152 = vmatpush.bf16.msra.mxu0 %v2135
    %3153 = vmatmul.bf16.gmra.mxu0 %v589
    %v3154 = vpop.f32.mrf.mxu0
    %v3155 = vadd.f32 %v3142, %v3154
    %v3156 = vpop.f32.mrf.mxu0
    %3157 = vdwg.mxu0
    %v3158 = vmax.f32 %v2843, 0.0
    %v3159 = vmax.f32 %v3155, 0.0
    %v3160 = vpack.c.bf16 %v3158, %v3158
    %v3161 = vpack.c.bf16 %v3159, %v3159
    %v3162 = vld [vmem:[#allocation8] sm:$0xff]
    %v3163 = vld [vmem:[#allocation8 + $0x8] sm:$0xff]
    %v3164 = vld [vmem:[#allocation8 + $0x10] sm:$0xff]
    %v3165 = vld [vmem:[#allocation8 + $0x18] sm:$0xff]
    %v3166 = vld [vmem:[#allocation8 + $0x20] sm:$0xff]
    %v3167 = vld [vmem:[#allocation8 + $0x28] sm:$0xff]
    %v3168 = vld [vmem:[#allocation8 + $0x30] sm:$0xff]
    %v3169 = vld [vmem:[#allocation8 + $0x38] sm:$0xff]
    %v3170 = vld [vmem:[#allocation8 + $0x40] sm:$0xff]
    %v3171 = vld [vmem:[#allocation8 + $0x48] sm:$0xff]
    %v3172 = vld [vmem:[#allocation8 + $0x50] sm:$0xff]
    %v3173 = vld [vmem:[#allocation8 + $0x58] sm:$0xff]
    %v3174 = vld [vmem:[#allocation8 + $0x60] sm:$0xff]
    %v3175 = vld [vmem:[#allocation8 + $0x68] sm:$0xff]
    %v3176 = vld [vmem:[#allocation8 + $0x70] sm:$0xff]
    %v3177 = vld [vmem:[#allocation8 + $0x78] sm:$0xff]
    %v3178 = vld [vmem:[#allocation8 + $0x80] sm:$0xff]
    %v3179 = vld [vmem:[#allocation8 + $0x88] sm:$0xff]
    %v3180 = vld [vmem:[#allocation8 + $0x90] sm:$0xff]
    %v3181 = vld [vmem:[#allocation8 + $0x98] sm:$0xff]
    %v3182 = vld [vmem:[#allocation8 + $0xa0] sm:$0xff]
    %v3183 = vld [vmem:[#allocation8 + $0xa8] sm:$0xff]
    %v3184 = vld [vmem:[#allocation8 + $0xb0] sm:$0xff]
    %v3185 = vld [vmem:[#allocation8 + $0xb8] sm:$0xff]
    %v3186 = vld [vmem:[#allocation8 + $0xc0] sm:$0xff]
    %v3187 = vld [vmem:[#allocation8 + $0xc8] sm:$0xff]
    %v3188 = vld [vmem:[#allocation8 + $0xd0] sm:$0xff]
    %v3189 = vld [vmem:[#allocation8 + $0xd8] sm:$0xff]
    %v3190 = vld [vmem:[#allocation8 + $0xe0] sm:$0xff]
    %v3191 = vld [vmem:[#allocation8 + $0xe8] sm:$0xff]
    %v3192 = vld [vmem:[#allocation8 + $0xf0] sm:$0xff]
    %v3193 = vld [vmem:[#allocation8 + $0xf8] sm:$0xff]
    %v3194 = vld [vmem:[#allocation10] sm:$0x3]
    %v3196 = vperm.slane %v3194, 0
    %v3197 = vperm.slane %v3194, 1
    %v3232 = vunpack.c.l.b16 %v3162
    %v3233 = vunpack.c.h.b16 %v3162
    %v3234 = vunpack.c.l.b16 %v3163
    %v3235 = vunpack.c.h.b16 %v3163
    %v3236 = vunpack.c.l.b16 %v3164
    %v3237 = vunpack.c.h.b16 %v3164
    %v3238 = vunpack.c.l.b16 %v3165
    %v3239 = vunpack.c.h.b16 %v3165
    %v3240 = vunpack.c.l.b16 %v3166
    %v3241 = vunpack.c.h.b16 %v3166
    %v3242 = vunpack.c.l.b16 %v3167
    %v3243 = vunpack.c.h.b16 %v3167
    %v3244 = vunpack.c.l.b16 %v3168
    %v3245 = vunpack.c.h.b16 %v3168
    %v3246 = vunpack.c.l.b16 %v3169
    %v3247 = vunpack.c.h.b16 %v3169
    %v3248 = vunpack.c.l.b16 %v3170
    %v3249 = vunpack.c.h.b16 %v3170
    %v3250 = vunpack.c.l.b16 %v3171
    %v3251 = vunpack.c.h.b16 %v3171
    %v3252 = vunpack.c.l.b16 %v3172
    %v3253 = vunpack.c.h.b16 %v3172
    %v3254 = vunpack.c.l.b16 %v3173
    %v3255 = vunpack.c.h.b16 %v3173
    %v3256 = vunpack.c.l.b16 %v3174
    %v3257 = vunpack.c.h.b16 %v3174
    %v3258 = vunpack.c.l.b16 %v3175
    %v3259 = vunpack.c.h.b16 %v3175
    %v3260 = vunpack.c.l.b16 %v3176
    %v3261 = vunpack.c.h.b16 %v3176
    %v3262 = vunpack.c.l.b16 %v3177
    %v3263 = vunpack.c.h.b16 %v3177
    %v3264 = vunpack.c.l.b16 %v3178
    %v3265 = vunpack.c.h.b16 %v3178
    %v3266 = vunpack.c.l.b16 %v3179
    %v3267 = vunpack.c.h.b16 %v3179
    %v3268 = vunpack.c.l.b16 %v3180
    %v3269 = vunpack.c.h.b16 %v3180
    %v3270 = vunpack.c.l.b16 %v3181
    %v3271 = vunpack.c.h.b16 %v3181
    %v3272 = vunpack.c.l.b16 %v3182
    %v3273 = vunpack.c.h.b16 %v3182
    %v3274 = vunpack.c.l.b16 %v3183
    %v3275 = vunpack.c.h.b16 %v3183
    %v3276 = vunpack.c.l.b16 %v3184
    %v3277 = vunpack.c.h.b16 %v3184
    %v3278 = vunpack.c.l.b16 %v3185
    %v3279 = vunpack.c.h.b16 %v3185
    %v3280 = vunpack.c.l.b16 %v3186
    %v3281 = vunpack.c.h.b16 %v3186
    %v3282 = vunpack.c.l.b16 %v3187
    %v3283 = vunpack.c.h.b16 %v3187
    %v3284 = vunpack.c.l.b16 %v3188
    %v3285 = vunpack.c.h.b16 %v3188
    %v3286 = vunpack.c.l.b16 %v3189
    %v3287 = vunpack.c.h.b16 %v3189
    %v3288 = vunpack.c.l.b16 %v3190
    %v3289 = vunpack.c.h.b16 %v3190
    %v3290 = vunpack.c.l.b16 %v3191
    %v3291 = vunpack.c.h.b16 %v3191
    %v3292 = vunpack.c.l.b16 %v3192
    %v3293 = vunpack.c.h.b16 %v3192
    %v3294 = vunpack.c.l.b16 %v3193
    %v3295 = vunpack.c.h.b16 %v3193
    %v3296 = vpack.c.b16 %v3234, %v3232
    %v3297 = vpack.c.b16 %v3235, %v3233
    %v3298 = vpack.c.b16 %v3238, %v3236
    %v3299 = vpack.c.b16 %v3239, %v3237
    %v3300 = vpack.c.b16 %v3242, %v3240
    %v3301 = vpack.c.b16 %v3243, %v3241
    %v3302 = vpack.c.b16 %v3246, %v3244
    %v3303 = vpack.c.b16 %v3247, %v3245
    %v3304 = vpack.c.b16 %v3250, %v3248
    %v3305 = vpack.c.b16 %v3251, %v3249
    %v3306 = vpack.c.b16 %v3254, %v3252
    %v3307 = vpack.c.b16 %v3255, %v3253
    %v3308 = vpack.c.b16 %v3258, %v3256
    %v3309 = vpack.c.b16 %v3259, %v3257
    %v3310 = vpack.c.b16 %v3262, %v3260
    %v3311 = vpack.c.b16 %v3263, %v3261
    %v3312 = vpack.c.b16 %v3266, %v3264
    %v3313 = vpack.c.b16 %v3267, %v3265
    %v3314 = vpack.c.b16 %v3270, %v3268
    %v3315 = vpack.c.b16 %v3271, %v3269
    %v3316 = vpack.c.b16 %v3274, %v3272
    %v3317 = vpack.c.b16 %v3275, %v3273
    %v3318 = vpack.c.b16 %v3278, %v3276
    %v3319 = vpack.c.b16 %v3279, %v3277
    %v3320 = vpack.c.b16 %v3282, %v3280
    %v3321 = vpack.c.b16 %v3283, %v3281
    %v3322 = vpack.c.b16 %v3286, %v3284
    %v3323 = vpack.c.b16 %v3287, %v3285
    %v3324 = vpack.c.b16 %v3290, %v3288
    %v3325 = vpack.c.b16 %v3291, %v3289
    %v3326 = vpack.c.b16 %v3294, %v3292
    %v3327 = vpack.c.b16 %v3295, %v3293
    %3360 = vmatpush.bf16.msra.mxu0 %v3310
    %3361 = vmatpush.bf16.msra.mxu0 %v3308
    %3362 = vmatpush.bf16.msra.mxu0 %v3306
    %3363 = vmatpush.bf16.msra.mxu0 %v3304
    %3364 = vmatpush.bf16.msra.mxu0 %v3302
    %3365 = vmatpush.bf16.msra.mxu0 %v3300
    %3366 = vmatpush.bf16.msra.mxu0 %v3298
    %3367 = vmatpush.bf16.msra.mxu0 %v3296
    %3368 = vmatmul.bf16.gmra.mxu0 %v3160
    %v3369 = vpop.f32.mrf.mxu0
    %v3370 = vadd.f32 %v3196, %v3369
    %v3371 = vpop.f32.mrf.mxu0
    %3372 = vdwg.mxu0
    %3373 = vmatpush.bf16.msra.mxu0 %v3326
    %3374 = vmatpush.bf16.msra.mxu0 %v3324
    %3375 = vmatpush.bf16.msra.mxu0 %v3322
    %3376 = vmatpush.bf16.msra.mxu0 %v3320
    %3377 = vmatpush.bf16.msra.mxu0 %v3318
    %3378 = vmatpush.bf16.msra.mxu0 %v3316
    %3379 = vmatpush.bf16.msra.mxu0 %v3314
    %3380 = vmatpush.bf16.msra.mxu0 %v3312
    %3381 = vmatmul.bf16.gmra.mxu0 %v3161
    %v3382 = vpop.f32.mrf.mxu0
    %v3383 = vadd.f32 %v3370, %v3382
    %v3384 = vpop.f32.mrf.mxu0
    %3385 = vdwg.mxu0
    %3386 = vmatpush.bf16.msra.mxu0 %v3311
    %3387 = vmatpush.bf16.msra.mxu0 %v3309
    %3388 = vmatpush.bf16.msra.mxu0 %v3307
    %3389 = vmatpush.bf16.msra.mxu0 %v3305
    %3390 = vmatpush.bf16.msra.mxu0 %v3303
    %3391 = vmatpush.bf16.msra.mxu0 %v3301
    %3392 = vmatpush.bf16.msra.mxu0 %v3299
    %3393 = vmatpush.bf16.msra.mxu0 %v3297
    %3394 = vmatmul.bf16.gmra.mxu0 %v3160
    %v3395 = vpop.f32.mrf.mxu0
    %v3396 = vadd.f32 %v3197, %v3395
    %v3397 = vpop.f32.mrf.mxu0
    %3398 = vdwg.mxu0
    %3399 = vmatpush.bf16.msra.mxu0 %v3327
    %3400 = vmatpush.bf16.msra.mxu0 %v3325
    %3401 = vmatpush.bf16.msra.mxu0 %v3323
    %3402 = vmatpush.bf16.msra.mxu0 %v3321
    %3403 = vmatpush.bf16.msra.mxu0 %v3319
    %3404 = vmatpush.bf16.msra.mxu0 %v3317
    %3405 = vmatpush.bf16.msra.mxu0 %v3315
    %3406 = vmatpush.bf16.msra.mxu0 %v3313
    %3407 = vmatmul.bf16.gmra.mxu0 %v3161
    %v3408 = vpop.f32.mrf.mxu0
    %v3409 = vadd.f32 %v3396, %v3408
    %v3410 = vpop.f32.mrf.mxu0
    %3411 = vdwg.mxu0
    %v3412 = vmax.f32 %v3383, 0.0
    %v3413 = vmax.f32 %v3409, 0.0
    %v3414 = vpack.c.bf16 %v3412, %v3412
    %v3415 = vpack.c.bf16 %v3413, %v3413
    %v3416 = vld [vmem:[#allocation11] sm:$0xf]
    %v3417 = vld [vmem:[#allocation11 + $0x4] sm:$0xf]
    %v3418 = vld [vmem:[#allocation11 + $0x8] sm:$0xf]
    %v3419 = vld [vmem:[#allocation11 + $0xc] sm:$0xf]
    %v3420 = vld [vmem:[#allocation11 + $0x10] sm:$0xf]
    %v3421 = vld [vmem:[#allocation11 + $0x14] sm:$0xf]
    %v3422 = vld [vmem:[#allocation11 + $0x18] sm:$0xf]
    %v3423 = vld [vmem:[#allocation11 + $0x1c] sm:$0xf]
    %v3424 = vld [vmem:[#allocation11 + $0x20] sm:$0xf]
    %v3425 = vld [vmem:[#allocation11 + $0x24] sm:$0xf]
    %v3426 = vld [vmem:[#allocation11 + $0x28] sm:$0xf]
    %v3427 = vld [vmem:[#allocation11 + $0x2c] sm:$0xf]
    %v3428 = vld [vmem:[#allocation11 + $0x30] sm:$0xf]
    %v3429 = vld [vmem:[#allocation11 + $0x34] sm:$0xf]
    %v3430 = vld [vmem:[#allocation11 + $0x38] sm:$0xf]
    %v3431 = vld [vmem:[#allocation11 + $0x3c] sm:$0xf]
    %v3432 = vld [vmem:[#allocation11 + $0x40] sm:$0xf]
    %v3433 = vld [vmem:[#allocation11 + $0x44] sm:$0xf]
    %v3434 = vld [vmem:[#allocation11 + $0x48] sm:$0xf]
    %v3435 = vld [vmem:[#allocation11 + $0x4c] sm:$0xf]
    %v3436 = vld [vmem:[#allocation11 + $0x50] sm:$0xf]
    %v3437 = vld [vmem:[#allocation11 + $0x54] sm:$0xf]
    %v3438 = vld [vmem:[#allocation11 + $0x58] sm:$0xf]
    %v3439 = vld [vmem:[#allocation11 + $0x5c] sm:$0xf]
    %v3440 = vld [vmem:[#allocation11 + $0x60] sm:$0xf]
    %v3441 = vld [vmem:[#allocation11 + $0x64] sm:$0xf]
    %v3442 = vld [vmem:[#allocation11 + $0x68] sm:$0xf]
    %v3443 = vld [vmem:[#allocation11 + $0x6c] sm:$0xf]
    %v3444 = vld [vmem:[#allocation11 + $0x70] sm:$0xf]
    %v3445 = vld [vmem:[#allocation11 + $0x74] sm:$0xf]
    %v3446 = vld [vmem:[#allocation11 + $0x78] sm:$0xf]
    %v3447 = vld [vmem:[#allocation11 + $0x7c] sm:$0xf]
    %v3448 = vld [vmem:[#allocation13] sm:$0x1]
    %v3450 = vperm.slane %v3448, 0
    %v3484 = vunpack.c.l.b16 %v3416
    %v3485 = vunpack.c.l.b16 %v3417
    %v3486 = vunpack.c.l.b16 %v3418
    %v3487 = vunpack.c.l.b16 %v3419
    %v3488 = vunpack.c.l.b16 %v3420
    %v3489 = vunpack.c.l.b16 %v3421
    %v3490 = vunpack.c.l.b16 %v3422
    %v3491 = vunpack.c.l.b16 %v3423
    %v3492 = vunpack.c.l.b16 %v3424
    %v3493 = vunpack.c.l.b16 %v3425
    %v3494 = vunpack.c.l.b16 %v3426
    %v3495 = vunpack.c.l.b16 %v3427
    %v3496 = vunpack.c.l.b16 %v3428
    %v3497 = vunpack.c.l.b16 %v3429
    %v3498 = vunpack.c.l.b16 %v3430
    %v3499 = vunpack.c.l.b16 %v3431
    %v3500 = vunpack.c.l.b16 %v3432
    %v3501 = vunpack.c.l.b16 %v3433
    %v3502 = vunpack.c.l.b16 %v3434
    %v3503 = vunpack.c.l.b16 %v3435
    %v3504 = vunpack.c.l.b16 %v3436
    %v3505 = vunpack.c.l.b16 %v3437
    %v3506 = vunpack.c.l.b16 %v3438
    %v3507 = vunpack.c.l.b16 %v3439
    %v3508 = vunpack.c.l.b16 %v3440
    %v3509 = vunpack.c.l.b16 %v3441
    %v3510 = vunpack.c.l.b16 %v3442
    %v3511 = vunpack.c.l.b16 %v3443
    %v3512 = vunpack.c.l.b16 %v3444
    %v3513 = vunpack.c.l.b16 %v3445
    %v3514 = vunpack.c.l.b16 %v3446
    %v3515 = vunpack.c.l.b16 %v3447
    %v3516 = vpack.c.b16 %v3485, %v3484
    %v3517 = vpack.c.b16 %v3487, %v3486
    %v3518 = vpack.c.b16 %v3489, %v3488
    %v3519 = vpack.c.b16 %v3491, %v3490
    %v3520 = vpack.c.b16 %v3493, %v3492
    %v3521 = vpack.c.b16 %v3495, %v3494
    %v3522 = vpack.c.b16 %v3497, %v3496
    %v3523 = vpack.c.b16 %v3499, %v3498
    %v3524 = vpack.c.b16 %v3501, %v3500
    %v3525 = vpack.c.b16 %v3503, %v3502
    %v3526 = vpack.c.b16 %v3505, %v3504
    %v3527 = vpack.c.b16 %v3507, %v3506
    %v3528 = vpack.c.b16 %v3509, %v3508
    %v3529 = vpack.c.b16 %v3511, %v3510
    %v3530 = vpack.c.b16 %v3513, %v3512
    %v3531 = vpack.c.b16 %v3515, %v3514
    %3548 = vmatpush.bf16.msra.mxu0 %v3523
    %3549 = vmatpush.bf16.msra.mxu0 %v3522
    %3550 = vmatpush.bf16.msra.mxu0 %v3521
    %3551 = vmatpush.bf16.msra.mxu0 %v3520
    %3552 = vmatpush.bf16.msra.mxu0 %v3519
    %3553 = vmatpush.bf16.msra.mxu0 %v3518
    %3554 = vmatpush.bf16.msra.mxu0 %v3517
    %3555 = vmatpush.bf16.msra.mxu0 %v3516
    %3556 = vmatmul.bf16.gmra.mxu0 %v3414
    %v3557 = vpop.f32.mrf.mxu0
    %v3558 = vadd.f32 %v3450, %v3557
    %v3559 = vpop.f32.mrf.mxu0
    %3560 = vdwg.mxu0
    %3561 = vmatpush.bf16.msra.mxu0 %v3531
    %3562 = vmatpush.bf16.msra.mxu0 %v3530
    %3563 = vmatpush.bf16.msra.mxu0 %v3529
    %3564 = vmatpush.bf16.msra.mxu0 %v3528
    %3565 = vmatpush.bf16.msra.mxu0 %v3527
    %3566 = vmatpush.bf16.msra.mxu0 %v3526
    %3567 = vmatpush.bf16.msra.mxu0 %v3525
    %3568 = vmatpush.bf16.msra.mxu0 %v3524
    %3569 = vmatmul.bf16.gmra.mxu0 %v3415
    %v3570 = vpop.f32.mrf.mxu0
    %v3571 = vadd.f32 %v3558, %v3570
    %v3572 = vpop.f32.mrf.mxu0
    %3573 = vdwg.mxu0
    %3574 = vst [vmem:[#allocation14] sm:$0xff] %v3571
    // Predicated region
    $region58: #{tpu_custom_call.1} parent=1 // pred_check
      _
    $region59: #{tpu_custom_call.1} parent=1 // pred_check_branch
      %3576 = sbr.rel (0) target = $region61
    $region60: #{tpu_custom_call.1} parent=1 // pred_region
      %3578 = vsyncadd [#allocation4], 0
      %s3580 = sshll.u32 [#allocation14], 4
      %s3581 = int_to_ptr.vmem [resolvable:$true] %s3580
      %s3582 = sshll.u32 %s7, 4
      %s3583 = int_to_ptr.hbm [resolvable:$true] %s3582
      %3585 = dma.vmem_to_hbm [thread:$0]  %s3581, 128, %s3583, [#allocation4]
    $region61: #{tpu_custom_call.1} parent=1 // pred_fallthru
      _
    // Predicated region
    $region62: #{tpu_custom_call.1} parent=1 // pred_check
      _
    $region63: #{tpu_custom_call.1} parent=1 // pred_check_branch
      %3587 = sbr.rel (0) target = $region65
    $region64: #{tpu_custom_call.1} parent=1 // pred_region
      %3589 = dma.done [#allocation4], 128
    $region65: #{tpu_custom_call.1} parent=1 // pred_fallthru
      _
    %3590 = vsyncpa [#allocation3], 1
    %3591 = vsyncpa [#allocation6], 1
    %3592 = vsyncpa [#allocation9], 1
    %3593 = vsyncpa [#allocation12], 1
    %3594 = vsyncpa [#allocation4], 1

</llo_original>
